<compile_context>
chip_gen: v7x
topology: tpu7x:2x2x1
jax: 0.10.0
libtpu: 0.0.40
codegen_flags: <defaults>
</compile_context>

<pallas_src>
import jax
import jax.numpy as jnp
from jax.experimental import pallas as pl
from jax.experimental.pallas import tpu as pltpu


def _round_up(v, m):
    return -(-v // m) * m


def _make_reverb_kernel(nsub, n_hist, w):
    """Conv-as-matmul kernel over one (row_tile, nsub*w) folded-row tile."""

    def kernel(x_ref, halo_ref, hc_ref, hh_ref, o_ref):
        # x_ref   : (row_tile, nsub*w)   bf16  current time block (folded rows)
        # halo_ref: (row_tile, n_hist*w) bf16  causal history (zeros where none)
        # hc_ref  : (w, w)               bf16  Toeplitz taps, distance-0 chunk
        # hh_ref  : (n_hist*w, w)        bf16  Toeplitz taps, distance 1..n_hist
        # o_ref   : (row_tile, nsub*w)   f32   output (each sub-block written once)
        hc = hc_ref[...]
        hh = [hh_ref[(d - 1) * w:d * w, :] for d in range(1, n_hist + 1)]
        for s in range(nsub):                 # static unroll: W-wide output sub-blocks
            cur = x_ref[:, s * w:(s + 1) * w]
            acc = jnp.dot(cur, hc, preferred_element_type=jnp.float32)
            for d in range(1, n_hist + 1):    # static unroll: causal history chunks
                if s - d >= 0:
                    # history chunk lives inside this block's VMEM tile
                    prev = x_ref[:, (s - d) * w:(s - d + 1) * w]
                else:
                    # history chunk comes from the previous block (halo input)
                    c0 = (s - d + n_hist) * w
                    prev = halo_ref[:, c0:c0 + w]
                acc = acc + jnp.dot(prev, hh[d - 1],
                                    preferred_element_type=jnp.float32)
            o_ref[:, s * w:(s + 1) * w] = acc.astype(o_ref.dtype)

    return kernel


def _build_tap_matrices(taps, w, n_hist, dtype):
    """Banded-Toeplitz tap chunks: y_sub = x_cur @ Hc + sum_d x_hist_d @ Hh[d]."""
    L = taps.shape[0]
    k = jnp.arange(w)[:, None]                 # input index within a chunk
    m = jnp.arange(w)[None, :]                 # output index within a sub-block
    d0 = m - k                                 # tap index, distance-0 chunk
    hc = jnp.where((d0 >= 0) & (d0 < L),
                   jnp.take(taps, jnp.clip(d0, 0, L - 1)), 0.0)
    hs = []
    for d in range(1, n_hist + 1):             # history chunk at distance d*w
        dd = d * w + m - k                     # tap index (always >= 1)
        hs.append(jnp.where(dd < L, jnp.take(taps, jnp.clip(dd, 0, L - 1)), 0.0))
    hh = jnp.concatenate(hs, axis=0)           # (n_hist*w, w)
    return hc.astype(dtype), hh.astype(dtype)


def apply_reverb(x, ir, *, w_blk=128, t_blk_target=2048, row_tile_target=256,
                 compute_dtype=jnp.bfloat16):
    """Causal convolution of each row of x with ir, trimmed to the input length.

    x  : [B, T] float32 audio rows
    ir : [1, L] float32 RIR (channel-averaged, unsqueezed as in the module)
    returns [B, T] float32
    """
    B, T = x.shape
    L = ir.shape[-1]
    taps = ir.reshape(-1).astype(jnp.float32)
    out_dtype = x.dtype

    # ---- tile geometry ------------------------------------------------------
    w = max(128, _round_up(w_blk, 128))            # sub-block / contraction width
    n_hist = max(1, -(-max(L - 1, 0) // w))        # history chunks covering L-1 taps
    H = n_hist * w                                 # halo width per block

    # Large lane-dense time block; taps stay O((n_hist+1)*w^2) regardless.
    t_blk = max(w, min(_round_up(t_blk_target, w), _round_up(T, w)))
    nsub = t_blk // w

    Tp = _round_up(T, t_blk)
    n_tblk = Tp // t_blk
    Bp = _round_up(B, 16)                          # bf16 sublane packing

    xp = jnp.pad(x, ((0, Bp - B), (0, Tp - T))) if (Bp, Tp) != (B, T) else x
    xp = xp.astype(compute_dtype)

    # ---- fold independent time blocks into the MXU M dimension --------------
    x_f = xp.reshape(Bp * n_tblk, t_blk)

    # Causal history for every folded row: the H samples preceding its block
    # (zeros before t=0, i.e. for the first block of each audio row).
    xl = jnp.pad(xp, ((0, 0), (H, 0)))
    cols = (jnp.arange(n_tblk) * t_blk)[:, None] + jnp.arange(H)[None, :]
    halo_f = xl[:, cols].reshape(Bp * n_tblk, H)

    M_f = Bp * n_tblk
    row_tile = _round_up(min(row_tile_target, M_f), 16)
    Mp = _round_up(M_f, row_tile)
    if Mp != M_f:
        x_f = jnp.pad(x_f, ((0, Mp - M_f), (0, 0)))
        halo_f = jnp.pad(halo_f, ((0, Mp - M_f), (0, 0)))

    hc, hh = _build_tap_matrices(taps, w, n_hist, compute_dtype)

    # ---- VMEM budget / cost estimate ----------------------------------------
    vmem_est = (2 * row_tile * t_blk * 2           # x_f, double-buffered bf16
                + 2 * row_tile * H * 2             # halo, double-buffered bf16
                + (w * w + H * w) * 2              # taps (ideally single-buffered)
                + 2 * row_tile * t_blk * 4)        # f32 output, double-buffered
    vmem_limit = int(min(64 << 20, max(32 << 20, 2 * vmem_est)))

    flops = 2 * Mp * t_blk * (n_hist + 1) * w
    bytes_accessed = int(Mp * t_blk * 2 + Mp * H * 2 + (w * w + H * w) * 2
                         + Mp * t_blk * jnp.dtype(out_dtype).itemsize)

    kernel = _make_reverb_kernel(nsub, n_hist, w)

    def _run(tap_mode):
        def _tap_spec(shape):
            if tap_mode is None:
                return pl.BlockSpec(shape, lambda i: (0, 0))
            return pl.BlockSpec(shape, lambda i: (0, 0), pipeline_mode=tap_mode)

        return pl.pallas_call(
            kernel,
            out_shape=jax.ShapeDtypeStruct((Mp, t_blk), out_dtype),
            grid_spec=pltpu.PrefetchScalarGridSpec(
                num_scalar_prefetch=0,
                grid=(Mp // row_tile,),
                in_specs=[
                    pl.BlockSpec((row_tile, t_blk), lambda i: (i, 0)),
                    pl.BlockSpec((row_tile, H), lambda i: (i, 0)),
                    _tap_spec((w, w)),       # constant index -> VMEM-resident
                    _tap_spec((H, w)),
                ],
                out_specs=pl.BlockSpec((row_tile, t_blk), lambda i: (i, 0)),
            ),
            compiler_params=pltpu.CompilerParams(
                dimension_semantics=("parallel",),
                vmem_limit_bytes=vmem_limit,
            ),
            cost_estimate=pl.CostEstimate(
                flops=flops, transcendentals=0, bytes_accessed=bytes_accessed),
        )(x_f, halo_f, hc, hh)

    try:
        # Tap matrices have a constant index_map (never re-fetched): request a
        # single buffer to halve their VMEM footprint.
        y_f = _run(pl.Buffered(1))
    except Exception:
        # Fallback: default double-buffering (taps are small after the
        # sub-block restructure, so this costs little VMEM).
        y_f = _run(None)

    return y_f[:M_f].reshape(Bp, Tp)[:B, :T]


def make_synthetic_rir(key, length, fs=16000, t60=0.3):
    """Deterministic stand-in for the .mat-file RIR: decaying Gaussian noise."""
    noise = jax.random.normal(key, (length,), dtype=jnp.float32)
    t = jnp.arange(length, dtype=jnp.float32) / fs
    decay = jnp.exp(-6.908 * t / t60)          # -60 dB at t60
    rir = noise * decay
    rir = rir / jnp.max(jnp.abs(rir))
    return rir.reshape(1, length)              # matches module: (1, L) after unsqueeze


if __name__ == "__main__":
    key = jax.random.PRNGKey(0)
    k_x, k_ir = jax.random.split(key)

    B, T, L = 16, 512, 128
    x = jax.random.normal(k_x, (B, T), dtype=jnp.float32)
    ir = make_synthetic_rir(k_ir, L)

    y = apply_reverb(x, ir)
    y = jax.block_until_ready(y)
    assert y.shape == (B, T)

    # Reference on bf16-quantized inputs: the kernel feeds the MXU bf16 operands
    # with f32 accumulation (bf16*bf16 products are exact in f32), so only the
    # summation order differs from this f32 reference.
    x_q = x.astype(jnp.bfloat16).astype(jnp.float32)
    ir_q = ir.astype(jnp.bfloat16).astype(jnp.float32)
    y_ref = jnp.stack(
        [jnp.convolve(x_q[b], ir_q[0], mode="full")[:T] for b in range(B)],
        axis=0)
    assert jnp.allclose(y, y_ref, atol=2e-3, rtol=2e-3), "mismatch vs reference"

    print("KERNEL_OK")
</pallas_src>

<mosaic_0001>
module attributes {stable_mosaic.version = 11 : i64} {
  func.func @kernel(%arg0: i32, %arg1: memref<16x512xbf16, #tpu.memory_space<vmem>>, %arg2: memref<16x128xbf16, #tpu.memory_space<vmem>>, %arg3: memref<128x128xbf16, #tpu.memory_space<vmem>>, %arg4: memref<128x128xbf16, #tpu.memory_space<vmem>>, %arg5: memref<16x512xf32, #tpu.memory_space<vmem>>) attributes {dimension_semantics = [#tpu.dimension_semantics<parallel>], iteration_bounds = array<i64: 1>, scalar_prefetch = 0 : i64, scratch_operands = 0 : i64, tpu.core_type = #tpu.core_type<tc>, window_params = [{transform_indices = @transform_0, window_bounds = array<i64: 16, 512>}, {transform_indices = @transform_1, window_bounds = array<i64: 16, 128>}, {pipeline_mode = #tpu.pipeline_mode<synchronous>, transform_indices = @transform_2, window_bounds = array<i64: 128, 128>}, {pipeline_mode = #tpu.pipeline_mode<synchronous>, transform_indices = @transform_3, window_bounds = array<i64: 128, 128>}, {transform_indices = @transform_4, window_bounds = array<i64: 16, 512>}]} {
    %c0 = arith.constant 0 : index
    %c0_0 = arith.constant 0 : index
    %0 = vector.load %arg3[%c0, %c0_0] : memref<128x128xbf16, #tpu.memory_space<vmem>>, vector<128x128xbf16>
    %c0_1 = arith.constant 0 : index
    %c0_2 = arith.constant 0 : index
    %1 = vector.load %arg4[%c0_1, %c0_2] : memref<128x128xbf16, #tpu.memory_space<vmem>>, vector<128x128xbf16>
    %c0_3 = arith.constant 0 : index
    %c0_4 = arith.constant 0 : index
    %2 = vector.load %arg1[%c0_3, %c0_4] : memref<16x512xbf16, #tpu.memory_space<vmem>>, vector<16x128xbf16>
    %cst = arith.constant dense<0.000000e+00> : vector<16x128xf32>
    %3 = tpu.matmul %2, %0, %cst {dimension_numbers = #tpu.dot_dimension_numbers<[1], [0], [0], [1], [0, 0, 1, 1], [], []>} : vector<16x128xbf16>, vector<128x128xbf16>, vector<16x128xf32> -> vector<16x128xf32>
    %c0_5 = arith.constant 0 : index
    %c0_6 = arith.constant 0 : index
    %4 = vector.load %arg2[%c0_5, %c0_6] : memref<16x128xbf16, #tpu.memory_space<vmem>>, vector<16x128xbf16>
    %cst_7 = arith.constant dense<0.000000e+00> : vector<16x128xf32>
    %5 = tpu.matmul %4, %1, %cst_7 {dimension_numbers = #tpu.dot_dimension_numbers<[1], [0], [0], [1], [0, 0, 1, 1], [], []>} : vector<16x128xbf16>, vector<128x128xbf16>, vector<16x128xf32> -> vector<16x128xf32>
    %6 = arith.addf %3, %5 : vector<16x128xf32>
    %c0_8 = arith.constant 0 : index
    %c0_9 = arith.constant 0 : index
    %7 = vector.load %arg5[%c0_8, %c0_9] : memref<16x512xf32, #tpu.memory_space<vmem>>, vector<16x128xf32>
    tpu.vector_store %arg5[%c0_8, %c0_9], %6 {strides = array<i32>} : memref<16x512xf32, #tpu.memory_space<vmem>>, vector<16x128xf32>,
    %c0_10 = arith.constant 0 : index
    %c128 = arith.constant 128 : index
    %8 = vector.load %arg1[%c0_10, %c128] : memref<16x512xbf16, #tpu.memory_space<vmem>>, vector<16x128xbf16>
    %cst_11 = arith.constant dense<0.000000e+00> : vector<16x128xf32>
    %9 = tpu.matmul %8, %0, %cst_11 {dimension_numbers = #tpu.dot_dimension_numbers<[1], [0], [0], [1], [0, 0, 1, 1], [], []>} : vector<16x128xbf16>, vector<128x128xbf16>, vector<16x128xf32> -> vector<16x128xf32>
    %c0_12 = arith.constant 0 : index
    %c0_13 = arith.constant 0 : index
    %10 = vector.load %arg1[%c0_12, %c0_13] : memref<16x512xbf16, #tpu.memory_space<vmem>>, vector<16x128xbf16>
    %cst_14 = arith.constant dense<0.000000e+00> : vector<16x128xf32>
    %11 = tpu.matmul %10, %1, %cst_14 {dimension_numbers = #tpu.dot_dimension_numbers<[1], [0], [0], [1], [0, 0, 1, 1], [], []>} : vector<16x128xbf16>, vector<128x128xbf16>, vector<16x128xf32> -> vector<16x128xf32>
    %12 = arith.addf %9, %11 : vector<16x128xf32>
    %c0_15 = arith.constant 0 : index
    %c128_16 = arith.constant 128 : index
    %13 = vector.load %arg5[%c0_15, %c128_16] : memref<16x512xf32, #tpu.memory_space<vmem>>, vector<16x128xf32>
    tpu.vector_store %arg5[%c0_15, %c128_16], %12 {strides = array<i32>} : memref<16x512xf32, #tpu.memory_space<vmem>>, vector<16x128xf32>,
    %c0_17 = arith.constant 0 : index
    %c256 = arith.constant 256 : index
    %14 = vector.load %arg1[%c0_17, %c256] : memref<16x512xbf16, #tpu.memory_space<vmem>>, vector<16x128xbf16>
    %cst_18 = arith.constant dense<0.000000e+00> : vector<16x128xf32>
    %15 = tpu.matmul %14, %0, %cst_18 {dimension_numbers = #tpu.dot_dimension_numbers<[1], [0], [0], [1], [0, 0, 1, 1], [], []>} : vector<16x128xbf16>, vector<128x128xbf16>, vector<16x128xf32> -> vector<16x128xf32>
    %c0_19 = arith.constant 0 : index
    %c128_20 = arith.constant 128 : index
    %16 = vector.load %arg1[%c0_19, %c128_20] : memref<16x512xbf16, #tpu.memory_space<vmem>>, vector<16x128xbf16>
    %cst_21 = arith.constant dense<0.000000e+00> : vector<16x128xf32>
    %17 = tpu.matmul %16, %1, %cst_21 {dimension_numbers = #tpu.dot_dimension_numbers<[1], [0], [0], [1], [0, 0, 1, 1], [], []>} : vector<16x128xbf16>, vector<128x128xbf16>, vector<16x128xf32> -> vector<16x128xf32>
    %18 = arith.addf %15, %17 : vector<16x128xf32>
    %c0_22 = arith.constant 0 : index
    %c256_23 = arith.constant 256 : index
    %19 = vector.load %arg5[%c0_22, %c256_23] : memref<16x512xf32, #tpu.memory_space<vmem>>, vector<16x128xf32>
    tpu.vector_store %arg5[%c0_22, %c256_23], %18 {strides = array<i32>} : memref<16x512xf32, #tpu.memory_space<vmem>>, vector<16x128xf32>,
    %c0_24 = arith.constant 0 : index
    %c384 = arith.constant 384 : index
    %20 = vector.load %arg1[%c0_24, %c384] : memref<16x512xbf16, #tpu.memory_space<vmem>>, vector<16x128xbf16>
    %cst_25 = arith.constant dense<0.000000e+00> : vector<16x128xf32>
    %21 = tpu.matmul %20, %0, %cst_25 {dimension_numbers = #tpu.dot_dimension_numbers<[1], [0], [0], [1], [0, 0, 1, 1], [], []>} : vector<16x128xbf16>, vector<128x128xbf16>, vector<16x128xf32> -> vector<16x128xf32>
    %c0_26 = arith.constant 0 : index
    %c256_27 = arith.constant 256 : index
    %22 = vector.load %arg1[%c0_26, %c256_27] : memref<16x512xbf16, #tpu.memory_space<vmem>>, vector<16x128xbf16>
    %cst_28 = arith.constant dense<0.000000e+00> : vector<16x128xf32>
    %23 = tpu.matmul %22, %1, %cst_28 {dimension_numbers = #tpu.dot_dimension_numbers<[1], [0], [0], [1], [0, 0, 1, 1], [], []>} : vector<16x128xbf16>, vector<128x128xbf16>, vector<16x128xf32> -> vector<16x128xf32>
    %24 = arith.addf %21, %23 : vector<16x128xf32>
    %c0_29 = arith.constant 0 : index
    %c384_30 = arith.constant 384 : index
    %25 = vector.load %arg5[%c0_29, %c384_30] : memref<16x512xf32, #tpu.memory_space<vmem>>, vector<16x128xf32>
    tpu.vector_store %arg5[%c0_29, %c384_30], %24 {strides = array<i32>} : memref<16x512xf32, #tpu.memory_space<vmem>>, vector<16x128xf32>,
    return
  }
  func.func @transform_0(%arg0: i32) -> (i32, i32) {
    %c0_i32 = arith.constant 0 : i32
    %c0_i32_0 = arith.constant 0 : i32
    return %arg0, %c0_i32 : i32, i32
  }
  func.func @transform_1(%arg0: i32) -> (i32, i32) {
    %c0_i32 = arith.constant 0 : i32
    %c0_i32_0 = arith.constant 0 : i32
    return %arg0, %c0_i32 : i32, i32
  }
  func.func @transform_2(%arg0: i32) -> (i32, i32) {
    %c0_i32 = arith.constant 0 : i32
    %c0_i32_0 = arith.constant 0 : i32
    %c0_i32_1 = arith.constant 0 : i32
    return %c0_i32, %c0_i32_0 : i32, i32
  }
  func.func @transform_3(%arg0: i32) -> (i32, i32) {
    %c0_i32 = arith.constant 0 : i32
    %c0_i32_0 = arith.constant 0 : i32
    %c0_i32_1 = arith.constant 0 : i32
    return %c0_i32, %c0_i32_0 : i32, i32
  }
  func.func @transform_4(%arg0: i32) -> (i32, i32) {
    %c0_i32 = arith.constant 0 : i32
    %c0_i32_0 = arith.constant 0 : i32
    return %arg0, %c0_i32 : i32, i32
  }
}

module attributes {stable_mosaic.version = 11 : i64} {
  func.func @kernel(%arg0: i32, %arg1: memref<16x512xbf16, #tpu.memory_space<vmem>>, %arg2: memref<16x128xbf16, #tpu.memory_space<vmem>>, %arg3: memref<128x128xbf16, #tpu.memory_space<vmem>>, %arg4: memref<128x128xbf16, #tpu.memory_space<vmem>>, %arg5: memref<16x512xf32, #tpu.memory_space<vmem>>) attributes {dimension_semantics = [#tpu.dimension_semantics<parallel>], iteration_bounds = array<i64: 1>, scalar_prefetch = 0 : i64, scratch_operands = 0 : i64, tpu.core_type = #tpu.core_type<tc>, window_params = [{transform_indices = @transform_0, window_bounds = array<i64: 16, 512>}, {transform_indices = @transform_1, window_bounds = array<i64: 16, 128>}, {pipeline_mode = #tpu.pipeline_mode<synchronous>, transform_indices = @transform_2, window_bounds = array<i64: 128, 128>}, {pipeline_mode = #tpu.pipeline_mode<synchronous>, transform_indices = @transform_3, window_bounds = array<i64: 128, 128>}, {transform_indices = @transform_4, window_bounds = array<i64: 16, 512>}]} {
    %c0 = arith.constant 0 : index
    %c0_0 = arith.constant 0 : index
    %0 = vector.load %arg3[%c0, %c0_0] : memref<128x128xbf16, #tpu.memory_space<vmem>>, vector<128x128xbf16>
    %c0_1 = arith.constant 0 : index
    %c0_2 = arith.constant 0 : index
    %1 = vector.load %arg4[%c0_1, %c0_2] : memref<128x128xbf16, #tpu.memory_space<vmem>>, vector<128x128xbf16>
    %c0_3 = arith.constant 0 : index
    %c0_4 = arith.constant 0 : index
    %2 = vector.load %arg1[%c0_3, %c0_4] : memref<16x512xbf16, #tpu.memory_space<vmem>>, vector<16x128xbf16>
    %cst = arith.constant dense<0.000000e+00> : vector<16x128xf32>
    %3 = tpu.matmul %2, %0, %cst {dimension_numbers = #tpu.dot_dimension_numbers<[1], [0], [0], [1], [0, 0, 1, 1], [], []>} : vector<16x128xbf16>, vector<128x128xbf16>, vector<16x128xf32> -> vector<16x128xf32>
    %c0_5 = arith.constant 0 : index
    %c0_6 = arith.constant 0 : index
    %4 = vector.load %arg2[%c0_5, %c0_6] : memref<16x128xbf16, #tpu.memory_space<vmem>>, vector<16x128xbf16>
    %cst_7 = arith.constant dense<0.000000e+00> : vector<16x128xf32>
    %5 = tpu.matmul %4, %1, %cst_7 {dimension_numbers = #tpu.dot_dimension_numbers<[1], [0], [0], [1], [0, 0, 1, 1], [], []>} : vector<16x128xbf16>, vector<128x128xbf16>, vector<16x128xf32> -> vector<16x128xf32>
    %6 = arith.addf %3, %5 : vector<16x128xf32>
    %c0_8 = arith.constant 0 : index
    %c0_9 = arith.constant 0 : index
    %7 = vector.load %arg5[%c0_8, %c0_9] : memref<16x512xf32, #tpu.memory_space<vmem>>, vector<16x128xf32>
    tpu.vector_store %arg5[%c0_8, %c0_9], %6 {strides = array<i32>} : memref<16x512xf32, #tpu.memory_space<vmem>>, vector<16x128xf32>,
    %c0_10 = arith.constant 0 : index
    %c128 = arith.constant 128 : index
    %8 = vector.load %arg1[%c0_10, %c128] : memref<16x512xbf16, #tpu.memory_space<vmem>>, vector<16x128xbf16>
    %cst_11 = arith.constant dense<0.000000e+00> : vector<16x128xf32>
    %9 = tpu.matmul %8, %0, %cst_11 {dimension_numbers = #tpu.dot_dimension_numbers<[1], [0], [0], [1], [0, 0, 1, 1], [], []>} : vector<16x128xbf16>, vector<128x128xbf16>, vector<16x128xf32> -> vector<16x128xf32>
    %c0_12 = arith.constant 0 : index
    %c0_13 = arith.constant 0 : index
    %10 = vector.load %arg1[%c0_12, %c0_13] : memref<16x512xbf16, #tpu.memory_space<vmem>>, vector<16x128xbf16>
    %cst_14 = arith.constant dense<0.000000e+00> : vector<16x128xf32>
    %11 = tpu.matmul %10, %1, %cst_14 {dimension_numbers = #tpu.dot_dimension_numbers<[1], [0], [0], [1], [0, 0, 1, 1], [], []>} : vector<16x128xbf16>, vector<128x128xbf16>, vector<16x128xf32> -> vector<16x128xf32>
    %12 = arith.addf %9, %11 : vector<16x128xf32>
    %c0_15 = arith.constant 0 : index
    %c128_16 = arith.constant 128 : index
    %13 = vector.load %arg5[%c0_15, %c128_16] : memref<16x512xf32, #tpu.memory_space<vmem>>, vector<16x128xf32>
    tpu.vector_store %arg5[%c0_15, %c128_16], %12 {strides = array<i32>} : memref<16x512xf32, #tpu.memory_space<vmem>>, vector<16x128xf32>,
    %c0_17 = arith.constant 0 : index
    %c256 = arith.constant 256 : index
    %14 = vector.load %arg1[%c0_17, %c256] : memref<16x512xbf16, #tpu.memory_space<vmem>>, vector<16x128xbf16>
    %cst_18 = arith.constant dense<0.000000e+00> : vector<16x128xf32>
    %15 = tpu.matmul %14, %0, %cst_18 {dimension_numbers = #tpu.dot_dimension_numbers<[1], [0], [0], [1], [0, 0, 1, 1], [], []>} : vector<16x128xbf16>, vector<128x128xbf16>, vector<16x128xf32> -> vector<16x128xf32>
    %c0_19 = arith.constant 0 : index
    %c128_20 = arith.constant 128 : index
    %16 = vector.load %arg1[%c0_19, %c128_20] : memref<16x512xbf16, #tpu.memory_space<vmem>>, vector<16x128xbf16>
    %cst_21 = arith.constant dense<0.000000e+00> : vector<16x128xf32>
    %17 = tpu.matmul %16, %1, %cst_21 {dimension_numbers = #tpu.dot_dimension_numbers<[1], [0], [0], [1], [0, 0, 1, 1], [], []>} : vector<16x128xbf16>, vector<128x128xbf16>, vector<16x128xf32> -> vector<16x128xf32>
    %18 = arith.addf %15, %17 : vector<16x128xf32>
    %c0_22 = arith.constant 0 : index
    %c256_23 = arith.constant 256 : index
    %19 = vector.load %arg5[%c0_22, %c256_23] : memref<16x512xf32, #tpu.memory_space<vmem>>, vector<16x128xf32>
    tpu.vector_store %arg5[%c0_22, %c256_23], %18 {strides = array<i32>} : memref<16x512xf32, #tpu.memory_space<vmem>>, vector<16x128xf32>,
    %c0_24 = arith.constant 0 : index
    %c384 = arith.constant 384 : index
    %20 = vector.load %arg1[%c0_24, %c384] : memref<16x512xbf16, #tpu.memory_space<vmem>>, vector<16x128xbf16>
    %cst_25 = arith.constant dense<0.000000e+00> : vector<16x128xf32>
    %21 = tpu.matmul %20, %0, %cst_25 {dimension_numbers = #tpu.dot_dimension_numbers<[1], [0], [0], [1], [0, 0, 1, 1], [], []>} : vector<16x128xbf16>, vector<128x128xbf16>, vector<16x128xf32> -> vector<16x128xf32>
    %c0_26 = arith.constant 0 : index
    %c256_27 = arith.constant 256 : index
    %22 = vector.load %arg1[%c0_26, %c256_27] : memref<16x512xbf16, #tpu.memory_space<vmem>>, vector<16x128xbf16>
    %cst_28 = arith.constant dense<0.000000e+00> : vector<16x128xf32>
    %23 = tpu.matmul %22, %1, %cst_28 {dimension_numbers = #tpu.dot_dimension_numbers<[1], [0], [0], [1], [0, 0, 1, 1], [], []>} : vector<16x128xbf16>, vector<128x128xbf16>, vector<16x128xf32> -> vector<16x128xf32>
    %24 = arith.addf %21, %23 : vector<16x128xf32>
    %c0_29 = arith.constant 0 : index
    %c384_30 = arith.constant 384 : index
    %25 = vector.load %arg5[%c0_29, %c384_30] : memref<16x512xf32, #tpu.memory_space<vmem>>, vector<16x128xf32>
    tpu.vector_store %arg5[%c0_29, %c384_30], %24 {strides = array<i32>} : memref<16x512xf32, #tpu.memory_space<vmem>>, vector<16x128xf32>,
    return
  }
  func.func @transform_0(%arg0: i32) -> (i32, i32) {
    %c0_i32 = arith.constant 0 : i32
    %c0_i32_0 = arith.constant 0 : i32
    return %arg0, %c0_i32 : i32, i32
  }
  func.func @transform_1(%arg0: i32) -> (i32, i32) {
    %c0_i32 = arith.constant 0 : i32
    %c0_i32_0 = arith.constant 0 : i32
    return %arg0, %c0_i32 : i32, i32
  }
  func.func @transform_2(%arg0: i32) -> (i32, i32) {
    %c0_i32 = arith.constant 0 : i32
    %c0_i32_0 = arith.constant 0 : i32
    %c0_i32_1 = arith.constant 0 : i32
    return %c0_i32, %c0_i32_0 : i32, i32
  }
  func.func @transform_3(%arg0: i32) -> (i32, i32) {
    %c0_i32 = arith.constant 0 : i32
    %c0_i32_0 = arith.constant 0 : i32
    %c0_i32_1 = arith.constant 0 : i32
    return %c0_i32, %c0_i32_0 : i32, i32
  }
  func.func @transform_4(%arg0: i32) -> (i32, i32) {
    %c0_i32 = arith.constant 0 : i32
    %c0_i32_0 = arith.constant 0 : i32
    return %arg0, %c0_i32 : i32, i32
  }
}

</mosaic_0001>

<llo_original>
// kernel: tpu_custom_call.1
$region0: #{tpu_custom_call.1}
  #allocation0 [shape = 'u32[]', space=smem, size = 0x4, offset = 0x4, fixed_abs, tag = 'smem constant byte address 0x4 - core index']
  #allocation1 [shape = 'u32[144,128]{1,0:T(1,128)}', space=vmem, size = 0x12000, scoped, tag = 'internal scratch']
  %s0 = inlined_call_operand.hbm [shape: bf16[16,512], index: 0, kind: input, shape index: {}]
  %s1 = inlined_call_operand.hbm [shape: bf16[16,128], index: 1, kind: input, shape index: {}]
  %s2 = inlined_call_operand.hbm [shape: bf16[128,128], index: 2, kind: input, shape index: {}]
  %s3 = inlined_call_operand.hbm [shape: bf16[128,128], index: 3, kind: input, shape index: {}]
  %s4 = inlined_call_operand.hbm [shape: f32[16,512], index: 4, kind: output, shape index: {}]
  %s5 = sld [smem:[#allocation0]]
  $region42: #{tpu_custom_call.1} parent=0
    _
  %s7 = ssub.s32 1, %s5
  %s8 = scalar_select 0, %s7, %s5
  $region1: #{tpu_custom_call.1} parent=0
    #allocation2 [shape = 'u8[16384]{0}', space=vmem, size = 0x4000, scoped, tag = 'input window, operand 0, single buffered']
    #allocation3 [shape = 's32[1]{0}', space=sflag, size = 0x4, scoped, tag = 'scoped memory for tpu_custom_call.1']
    #allocation4 [shape = 's32[1]{0}', space=sflag, size = 0x4, scoped, tag = 'scoped memory for tpu_custom_call.1']
    #allocation5 [shape = 'u8[4096]{0}', space=vmem, size = 0x1000, scoped, tag = 'input window, operand 1, single buffered']
    #allocation6 [shape = 's32[1]{0}', space=sflag, size = 0x4, scoped, tag = 'scoped memory for tpu_custom_call.1']
    #allocation7 [shape = 'u8[32768]{0}', space=vmem, size = 0x8000, scoped, tag = 'input window, operand 2, single buffered']
    #allocation8 [shape = 'u8[32768]{0}', space=vmem, size = 0x8000, scoped, tag = 'input window, operand 3, single buffered']
    #allocation9 [shape = 's32[1]{0}', space=sflag, size = 0x4, scoped, tag = 'scoped memory for tpu_custom_call.1']
    #allocation10 [shape = 'u8[32768]{0}', space=vmem, size = 0x8000, scoped, tag = 'output window, operand 0, single buffered']
    %9 = vsyncpa [#allocation3], 0
    %10 = vsyncpa [#allocation6], 0
    %11 = vsyncpa [#allocation9], 0
    %12 = vsyncpa [#allocation4], 0
    // Predicated region
    $region2: #{tpu_custom_call.1} parent=1 // pred_check
      _
    $region3: #{tpu_custom_call.1} parent=1 // pred_check_branch
      %14 = sbr.rel (0) target = $region5
    $region4: #{tpu_custom_call.1} parent=1 // pred_region
      %s16 = ssub.s32 512, 512
      %17 = vsyncadd [#allocation3], %s16
      %s18 = sshll.u32 [#allocation2], 4
      %s19 = int_to_ptr.vmem [resolvable:$true] %s18
      %24 = dma.hbm_to_vmem [thread:$0]  %s0, 512, %s19, [#allocation3], 256, 256, 16
    $region5: #{tpu_custom_call.1} parent=1 // pred_fallthru
      _
    // Predicated region
    $region6: #{tpu_custom_call.1} parent=1 // pred_check
      _
    $region7: #{tpu_custom_call.1} parent=1 // pred_check_branch
      %26 = sbr.rel (0) target = $region9
    $region8: #{tpu_custom_call.1} parent=1 // pred_region
      %s28 = ssub.s32 128, 128
      %29 = vsyncadd [#allocation6], %s28
      %s30 = sshll.u32 [#allocation5], 4
      %s31 = int_to_ptr.vmem [resolvable:$true] %s30
      %36 = dma.hbm_to_vmem [thread:$0]  %s1, 128, %s31, [#allocation6], 64, 64, 4
    $region9: #{tpu_custom_call.1} parent=1 // pred_fallthru
      _
    // Predicated region
    $region10: #{tpu_custom_call.1} parent=1 // pred_check
      _
    $region11: #{tpu_custom_call.1} parent=1 // pred_check_branch
      %38 = sbr.rel (0) target = $region13
    $region12: #{tpu_custom_call.1} parent=1 // pred_region
      %s40 = ssub.s32 1024, 1024
      %41 = vsyncadd [#allocation6], %s40
      %s42 = sshll.u32 [#allocation7], 4
      %s43 = int_to_ptr.vmem [resolvable:$true] %s42
      %48 = dma.hbm_to_vmem [thread:$0]  %s2, 1024, %s43, [#allocation6], 64, 64, 4
    $region13: #{tpu_custom_call.1} parent=1 // pred_fallthru
      _
    // Predicated region
    $region14: #{tpu_custom_call.1} parent=1 // pred_check
      _
    $region15: #{tpu_custom_call.1} parent=1 // pred_check_branch
      %50 = sbr.rel (0) target = $region17
    $region16: #{tpu_custom_call.1} parent=1 // pred_region
      %s52 = ssub.s32 1024, 1024
      %53 = vsyncadd [#allocation9], %s52
      %s54 = sshll.u32 [#allocation8], 4
      %s55 = int_to_ptr.vmem [resolvable:$true] %s54
      %60 = dma.hbm_to_vmem [thread:$0]  %s3, 1024, %s55, [#allocation9], 64, 64, 4
    $region17: #{tpu_custom_call.1} parent=1 // pred_fallthru
      _
    // Predicated region
    $region18: #{tpu_custom_call.1} parent=1 // pred_check
      _
    $region19: #{tpu_custom_call.1} parent=1 // pred_check_branch
      %62 = sbr.rel (0) target = $region21
    $region20: #{tpu_custom_call.1} parent=1 // pred_region
      %63 = dma.done [#allocation3], 512
    $region21: #{tpu_custom_call.1} parent=1 // pred_fallthru
      _
    // Predicated region
    $region22: #{tpu_custom_call.1} parent=1 // pred_check
      _
    $region23: #{tpu_custom_call.1} parent=1 // pred_check_branch
      %65 = sbr.rel (0) target = $region25
    $region24: #{tpu_custom_call.1} parent=1 // pred_region
      %66 = dma.done [#allocation6], 128
    $region25: #{tpu_custom_call.1} parent=1 // pred_fallthru
      _
    // Predicated region
    $region26: #{tpu_custom_call.1} parent=1 // pred_check
      _
    $region27: #{tpu_custom_call.1} parent=1 // pred_check_branch
      %68 = sbr.rel (0) target = $region29
    $region28: #{tpu_custom_call.1} parent=1 // pred_region
      %69 = dma.done [#allocation6], 1024
    $region29: #{tpu_custom_call.1} parent=1 // pred_fallthru
      _
    // Predicated region
    $region30: #{tpu_custom_call.1} parent=1 // pred_check
      _
    $region31: #{tpu_custom_call.1} parent=1 // pred_check_branch
      %71 = sbr.rel (0) target = $region33
    $region32: #{tpu_custom_call.1} parent=1 // pred_region
      %72 = dma.done [#allocation9], 1024
    $region33: #{tpu_custom_call.1} parent=1 // pred_fallthru
      _
    %v74 = vld [vmem:[#allocation7] sm:$0xf]
    %v75 = vld [vmem:[#allocation7 + $0x4] sm:$0xf]
    %v76 = vld [vmem:[#allocation7 + $0x8] sm:$0xf]
    %v77 = vld [vmem:[#allocation7 + $0xc] sm:$0xf]
    %v78 = vld [vmem:[#allocation7 + $0x10] sm:$0xf]
    %v79 = vld [vmem:[#allocation7 + $0x14] sm:$0xf]
    %v80 = vld [vmem:[#allocation7 + $0x18] sm:$0xf]
    %v81 = vld [vmem:[#allocation7 + $0x1c] sm:$0xf]
    %v82 = vld [vmem:[#allocation7 + $0x20] sm:$0xf]
    %v83 = vld [vmem:[#allocation7 + $0x24] sm:$0xf]
    %v84 = vld [vmem:[#allocation7 + $0x28] sm:$0xf]
    %v85 = vld [vmem:[#allocation7 + $0x2c] sm:$0xf]
    %v86 = vld [vmem:[#allocation7 + $0x30] sm:$0xf]
    %v87 = vld [vmem:[#allocation7 + $0x34] sm:$0xf]
    %v88 = vld [vmem:[#allocation7 + $0x38] sm:$0xf]
    %v89 = vld [vmem:[#allocation7 + $0x3c] sm:$0xf]
    %v90 = vld [vmem:[#allocation8] sm:$0xf]
    %v91 = vld [vmem:[#allocation8 + $0x4] sm:$0xf]
    %v92 = vld [vmem:[#allocation8 + $0x8] sm:$0xf]
    %v93 = vld [vmem:[#allocation8 + $0xc] sm:$0xf]
    %v94 = vld [vmem:[#allocation8 + $0x10] sm:$0xf]
    %v95 = vld [vmem:[#allocation8 + $0x14] sm:$0xf]
    %v96 = vld [vmem:[#allocation8 + $0x18] sm:$0xf]
    %v97 = vld [vmem:[#allocation8 + $0x1c] sm:$0xf]
    %v98 = vld [vmem:[#allocation8 + $0x20] sm:$0xf]
    %v99 = vld [vmem:[#allocation8 + $0x24] sm:$0xf]
    %v100 = vld [vmem:[#allocation8 + $0x28] sm:$0xf]
    %v101 = vld [vmem:[#allocation8 + $0x2c] sm:$0xf]
    %v102 = vld [vmem:[#allocation8 + $0x30] sm:$0xf]
    %v103 = vld [vmem:[#allocation8 + $0x34] sm:$0xf]
    %v104 = vld [vmem:[#allocation8 + $0x38] sm:$0xf]
    %v105 = vld [vmem:[#allocation8 + $0x3c] sm:$0xf]
    %v106 = vld [vmem:[#allocation2] sm:$0xf]
    %v107 = vld [vmem:[#allocation2 + $0x10] sm:$0xf]
    %v108 = vld [vmem:[#allocation5] sm:$0xf]
    %v109 = vld [vmem:[#allocation5 + $0x4] sm:$0xf]
    %v112 = vunpack.c.l.b16 %v108
    %v113 = vunpack.c.l.b16 %v109
    %v114 = vpack.c.b16 %v113, %v112
    %v132 = vunpack.c.l.b16 %v90
    %v133 = vunpack.c.l.b16 %v91
    %v134 = vunpack.c.l.b16 %v92
    %v135 = vunpack.c.l.b16 %v93
    %v136 = vunpack.c.l.b16 %v94
    %v137 = vunpack.c.l.b16 %v95
    %v138 = vunpack.c.l.b16 %v96
    %v139 = vunpack.c.l.b16 %v97
    %v140 = vunpack.c.l.b16 %v98
    %v141 = vunpack.c.l.b16 %v99
    %v142 = vunpack.c.l.b16 %v100
    %v143 = vunpack.c.l.b16 %v101
    %v144 = vunpack.c.l.b16 %v102
    %v145 = vunpack.c.l.b16 %v103
    %v146 = vunpack.c.l.b16 %v104
    %v147 = vunpack.c.l.b16 %v105
    %v148 = vpack.c.b16 %v133, %v132
    %v149 = vpack.c.b16 %v135, %v134
    %v150 = vpack.c.b16 %v137, %v136
    %v151 = vpack.c.b16 %v139, %v138
    %v152 = vpack.c.b16 %v141, %v140
    %v153 = vpack.c.b16 %v143, %v142
    %v154 = vpack.c.b16 %v145, %v144
    %v155 = vpack.c.b16 %v147, %v146
    %164 = vmatprep.subr.bf16.mxu0 0
    %165 = vmatpush1.bf16.msra.mxu0 %v148
    %166 = vmatprep.subr.bf16.mxu0 0
    %167 = vmatpush1.bf16.msra.mxu0 %v149
    %168 = vmatprep.subr.bf16.mxu0 0
    %169 = vmatpush1.bf16.msra.mxu0 %v150
    %170 = vmatprep.subr.bf16.mxu0 0
    %171 = vmatpush1.bf16.msra.mxu0 %v151
    %172 = vmatprep.subr.bf16.mxu0 0
    %173 = vmatpush1.bf16.msra.mxu0 %v152
    %174 = vmatprep.subr.bf16.mxu0 0
    %175 = vmatpush1.bf16.msra.mxu0 %v153
    %176 = vmatprep.subr.bf16.mxu0 0
    %177 = vmatpush1.bf16.msra.mxu0 %v154
    %178 = vmatprep.subr.bf16.mxu0 0
    %179 = vmatpush1.bf16.msra.mxu0 %v155
    %180 = vmatprep.subr.bf16.mxu0 0
    %181 = vmatpush1.bf16.msra.mxu0 0
    %182 = vmatprep.subr.bf16.mxu0 0
    %183 = vmatpush1.bf16.msra.mxu0 0
    %184 = vmatprep.subr.bf16.mxu0 0
    %185 = vmatpush1.bf16.msra.mxu0 0
    %186 = vmatprep.subr.bf16.mxu0 0
    %187 = vmatpush1.bf16.msra.mxu0 0
    %188 = vmatprep.subr.bf16.mxu0 0
    %189 = vmatpush1.bf16.msra.mxu0 0
    %190 = vmatprep.subr.bf16.mxu0 0
    %191 = vmatpush1.bf16.msra.mxu0 0
    %192 = vmatprep.subr.bf16.mxu0 0
    %193 = vmatpush1.bf16.msra.mxu0 0
    %194 = vmatprep.subr.bf16.mxu0 0
    %195 = vmatpush1.bf16.msra.mxu0 0
    %196 = vmatprep.mubr.bf16.mxu0 0
    %197 = vmatmul.mubr.bf16.gmra.mrb[0].mxu0 %v114
    %v198 = vpop.f32.mrb[0].mxu0
    %v199 = vadd.f32 0.0, %v198
    %v200 = vpop.f32.mrb[0].mxu0
    %v201 = vpop.f32.mrb[0].mxu0
    %v202 = vadd.f32 0.0, %v201
    %v203 = vpop.f32.mrb[0].mxu0
    %204 = vdwg.mxu0
    %v207 = vunpack.c.l.b16 %v106
    %v208 = vunpack.c.l.b16 %v107
    %v209 = vpack.c.b16 %v208, %v207
    %v227 = vunpack.c.l.b16 %v74
    %v228 = vunpack.c.l.b16 %v75
    %v229 = vunpack.c.l.b16 %v76
    %v230 = vunpack.c.l.b16 %v77
    %v231 = vunpack.c.l.b16 %v78
    %v232 = vunpack.c.l.b16 %v79
    %v233 = vunpack.c.l.b16 %v80
    %v234 = vunpack.c.l.b16 %v81
    %v235 = vunpack.c.l.b16 %v82
    %v236 = vunpack.c.l.b16 %v83
    %v237 = vunpack.c.l.b16 %v84
    %v238 = vunpack.c.l.b16 %v85
    %v239 = vunpack.c.l.b16 %v86
    %v240 = vunpack.c.l.b16 %v87
    %v241 = vunpack.c.l.b16 %v88
    %v242 = vunpack.c.l.b16 %v89
    %v243 = vpack.c.b16 %v228, %v227
    %v244 = vpack.c.b16 %v230, %v229
    %v245 = vpack.c.b16 %v232, %v231
    %v246 = vpack.c.b16 %v234, %v233
    %v247 = vpack.c.b16 %v236, %v235
    %v248 = vpack.c.b16 %v238, %v237
    %v249 = vpack.c.b16 %v240, %v239
    %v250 = vpack.c.b16 %v242, %v241
    %259 = vmatprep.subr.bf16.mxu0 0
    %260 = vmatpush1.bf16.msra.mxu0 %v243
    %261 = vmatprep.subr.bf16.mxu0 0
    %262 = vmatpush1.bf16.msra.mxu0 %v244
    %263 = vmatprep.subr.bf16.mxu0 0
    %264 = vmatpush1.bf16.msra.mxu0 %v245
    %265 = vmatprep.subr.bf16.mxu0 0
    %266 = vmatpush1.bf16.msra.mxu0 %v246
    %267 = vmatprep.subr.bf16.mxu0 0
    %268 = vmatpush1.bf16.msra.mxu0 %v247
    %269 = vmatprep.subr.bf16.mxu0 0
    %270 = vmatpush1.bf16.msra.mxu0 %v248
    %271 = vmatprep.subr.bf16.mxu0 0
    %272 = vmatpush1.bf16.msra.mxu0 %v249
    %273 = vmatprep.subr.bf16.mxu0 0
    %274 = vmatpush1.bf16.msra.mxu0 %v250
    %275 = vmatprep.subr.bf16.mxu0 0
    %276 = vmatpush1.bf16.msra.mxu0 0
    %277 = vmatprep.subr.bf16.mxu0 0
    %278 = vmatpush1.bf16.msra.mxu0 0
    %279 = vmatprep.subr.bf16.mxu0 0
    %280 = vmatpush1.bf16.msra.mxu0 0
    %281 = vmatprep.subr.bf16.mxu0 0
    %282 = vmatpush1.bf16.msra.mxu0 0
    %283 = vmatprep.subr.bf16.mxu0 0
    %284 = vmatpush1.bf16.msra.mxu0 0
    %285 = vmatprep.subr.bf16.mxu0 0
    %286 = vmatpush1.bf16.msra.mxu0 0
    %287 = vmatprep.subr.bf16.mxu0 0
    %288 = vmatpush1.bf16.msra.mxu0 0
    %289 = vmatprep.subr.bf16.mxu0 0
    %290 = vmatpush1.bf16.msra.mxu0 0
    %291 = vmatprep.mubr.bf16.mxu0 0
    %292 = vmatmul.mubr.bf16.gmra.mrb[0].mxu0 %v209
    %v293 = vpop.f32.mrb[0].mxu0
    %v294 = vadd.f32 %v199, %v293
    %v295 = vpop.f32.mrb[0].mxu0
    %v296 = vpop.f32.mrb[0].mxu0
    %v297 = vadd.f32 %v202, %v296
    %v298 = vpop.f32.mrb[0].mxu0
    %299 = vdwg.mxu0
    %300 = vst [vmem:[#allocation10] sm:$0xff] %v294
    %301 = vst [vmem:[#allocation10 + $0x20] sm:$0xff] %v297
    %v302 = vld [vmem:[#allocation2 + $0x4] sm:$0xf]
    %v303 = vld [vmem:[#allocation2 + $0x14] sm:$0xf]
    %v304 = vld [vmem:[#allocation2] sm:$0xf]
    %v305 = vld [vmem:[#allocation2 + $0x10] sm:$0xf]
    %v308 = vunpack.c.l.b16 %v304
    %v309 = vunpack.c.l.b16 %v305
    %v310 = vpack.c.b16 %v309, %v308
    %312 = vmatprep.subr.bf16.mxu0 0
    %313 = vmatpush1.bf16.msra.mxu0 %v148
    %314 = vmatprep.subr.bf16.mxu0 0
    %315 = vmatpush1.bf16.msra.mxu0 %v149
    %316 = vmatprep.subr.bf16.mxu0 0
    %317 = vmatpush1.bf16.msra.mxu0 %v150
    %318 = vmatprep.subr.bf16.mxu0 0
    %319 = vmatpush1.bf16.msra.mxu0 %v151
    %320 = vmatprep.subr.bf16.mxu0 0
    %321 = vmatpush1.bf16.msra.mxu0 %v152
    %322 = vmatprep.subr.bf16.mxu0 0
    %323 = vmatpush1.bf16.msra.mxu0 %v153
    %324 = vmatprep.subr.bf16.mxu0 0
    %325 = vmatpush1.bf16.msra.mxu0 %v154
    %326 = vmatprep.subr.bf16.mxu0 0
    %327 = vmatpush1.bf16.msra.mxu0 %v155
    %328 = vmatprep.subr.bf16.mxu0 0
    %329 = vmatpush1.bf16.msra.mxu0 0
    %330 = vmatprep.subr.bf16.mxu0 0
    %331 = vmatpush1.bf16.msra.mxu0 0
    %332 = vmatprep.subr.bf16.mxu0 0
    %333 = vmatpush1.bf16.msra.mxu0 0
    %334 = vmatprep.subr.bf16.mxu0 0
    %335 = vmatpush1.bf16.msra.mxu0 0
    %336 = vmatprep.subr.bf16.mxu0 0
    %337 = vmatpush1.bf16.msra.mxu0 0
    %338 = vmatprep.subr.bf16.mxu0 0
    %339 = vmatpush1.bf16.msra.mxu0 0
    %340 = vmatprep.subr.bf16.mxu0 0
    %341 = vmatpush1.bf16.msra.mxu0 0
    %342 = vmatprep.subr.bf16.mxu0 0
    %343 = vmatpush1.bf16.msra.mxu0 0
    %344 = vmatprep.mubr.bf16.mxu0 0
    %345 = vmatmul.mubr.bf16.gmra.mrb[0].mxu0 %v310
    %v346 = vpop.f32.mrb[0].mxu0
    %v347 = vadd.f32 0.0, %v346
    %v348 = vpop.f32.mrb[0].mxu0
    %v349 = vpop.f32.mrb[0].mxu0
    %v350 = vadd.f32 0.0, %v349
    %v351 = vpop.f32.mrb[0].mxu0
    %352 = vdwg.mxu0
    %v355 = vunpack.c.l.b16 %v302
    %v356 = vunpack.c.l.b16 %v303
    %v357 = vpack.c.b16 %v356, %v355
    %359 = vmatprep.subr.bf16.mxu0 0
    %360 = vmatpush1.bf16.msra.mxu0 %v243
    %361 = vmatprep.subr.bf16.mxu0 0
    %362 = vmatpush1.bf16.msra.mxu0 %v244
    %363 = vmatprep.subr.bf16.mxu0 0
    %364 = vmatpush1.bf16.msra.mxu0 %v245
    %365 = vmatprep.subr.bf16.mxu0 0
    %366 = vmatpush1.bf16.msra.mxu0 %v246
    %367 = vmatprep.subr.bf16.mxu0 0
    %368 = vmatpush1.bf16.msra.mxu0 %v247
    %369 = vmatprep.subr.bf16.mxu0 0
    %370 = vmatpush1.bf16.msra.mxu0 %v248
    %371 = vmatprep.subr.bf16.mxu0 0
    %372 = vmatpush1.bf16.msra.mxu0 %v249
    %373 = vmatprep.subr.bf16.mxu0 0
    %374 = vmatpush1.bf16.msra.mxu0 %v250
    %375 = vmatprep.subr.bf16.mxu0 0
    %376 = vmatpush1.bf16.msra.mxu0 0
    %377 = vmatprep.subr.bf16.mxu0 0
    %378 = vmatpush1.bf16.msra.mxu0 0
    %379 = vmatprep.subr.bf16.mxu0 0
    %380 = vmatpush1.bf16.msra.mxu0 0
    %381 = vmatprep.subr.bf16.mxu0 0
    %382 = vmatpush1.bf16.msra.mxu0 0
    %383 = vmatprep.subr.bf16.mxu0 0
    %384 = vmatpush1.bf16.msra.mxu0 0
    %385 = vmatprep.subr.bf16.mxu0 0
    %386 = vmatpush1.bf16.msra.mxu0 0
    %387 = vmatprep.subr.bf16.mxu0 0
    %388 = vmatpush1.bf16.msra.mxu0 0
    %389 = vmatprep.subr.bf16.mxu0 0
    %390 = vmatpush1.bf16.msra.mxu0 0
    %391 = vmatprep.mubr.bf16.mxu0 0
    %392 = vmatmul.mubr.bf16.gmra.mrb[0].mxu0 %v357
    %v393 = vpop.f32.mrb[0].mxu0
    %v394 = vadd.f32 %v347, %v393
    %v395 = vpop.f32.mrb[0].mxu0
    %v396 = vpop.f32.mrb[0].mxu0
    %v397 = vadd.f32 %v350, %v396
    %v398 = vpop.f32.mrb[0].mxu0
    %399 = vdwg.mxu0
    %400 = vst [vmem:[#allocation10 + $0x8] sm:$0xff] %v394
    %401 = vst [vmem:[#allocation10 + $0x28] sm:$0xff] %v397
    %v402 = vld [vmem:[#allocation2 + $0x8] sm:$0xf]
    %v403 = vld [vmem:[#allocation2 + $0x18] sm:$0xf]
    %v404 = vld [vmem:[#allocation2 + $0x4] sm:$0xf]
    %v405 = vld [vmem:[#allocation2 + $0x14] sm:$0xf]
    %v408 = vunpack.c.l.b16 %v404
    %v409 = vunpack.c.l.b16 %v405
    %v410 = vpack.c.b16 %v409, %v408
    %412 = vmatprep.subr.bf16.mxu0 0
    %413 = vmatpush1.bf16.msra.mxu0 %v148
    %414 = vmatprep.subr.bf16.mxu0 0
    %415 = vmatpush1.bf16.msra.mxu0 %v149
    %416 = vmatprep.subr.bf16.mxu0 0
    %417 = vmatpush1.bf16.msra.mxu0 %v150
    %418 = vmatprep.subr.bf16.mxu0 0
    %419 = vmatpush1.bf16.msra.mxu0 %v151
    %420 = vmatprep.subr.bf16.mxu0 0
    %421 = vmatpush1.bf16.msra.mxu0 %v152
    %422 = vmatprep.subr.bf16.mxu0 0
    %423 = vmatpush1.bf16.msra.mxu0 %v153
    %424 = vmatprep.subr.bf16.mxu0 0
    %425 = vmatpush1.bf16.msra.mxu0 %v154
    %426 = vmatprep.subr.bf16.mxu0 0
    %427 = vmatpush1.bf16.msra.mxu0 %v155
    %428 = vmatprep.subr.bf16.mxu0 0
    %429 = vmatpush1.bf16.msra.mxu0 0
    %430 = vmatprep.subr.bf16.mxu0 0
    %431 = vmatpush1.bf16.msra.mxu0 0
    %432 = vmatprep.subr.bf16.mxu0 0
    %433 = vmatpush1.bf16.msra.mxu0 0
    %434 = vmatprep.subr.bf16.mxu0 0
    %435 = vmatpush1.bf16.msra.mxu0 0
    %436 = vmatprep.subr.bf16.mxu0 0
    %437 = vmatpush1.bf16.msra.mxu0 0
    %438 = vmatprep.subr.bf16.mxu0 0
    %439 = vmatpush1.bf16.msra.mxu0 0
    %440 = vmatprep.subr.bf16.mxu0 0
    %441 = vmatpush1.bf16.msra.mxu0 0
    %442 = vmatprep.subr.bf16.mxu0 0
    %443 = vmatpush1.bf16.msra.mxu0 0
    %444 = vmatprep.mubr.bf16.mxu0 0
    %445 = vmatmul.mubr.bf16.gmra.mrb[0].mxu0 %v410
    %v446 = vpop.f32.mrb[0].mxu0
    %v447 = vadd.f32 0.0, %v446
    %v448 = vpop.f32.mrb[0].mxu0
    %v449 = vpop.f32.mrb[0].mxu0
    %v450 = vadd.f32 0.0, %v449
    %v451 = vpop.f32.mrb[0].mxu0
    %452 = vdwg.mxu0
    %v455 = vunpack.c.l.b16 %v402
    %v456 = vunpack.c.l.b16 %v403
    %v457 = vpack.c.b16 %v456, %v455
    %459 = vmatprep.subr.bf16.mxu0 0
    %460 = vmatpush1.bf16.msra.mxu0 %v243
    %461 = vmatprep.subr.bf16.mxu0 0
    %462 = vmatpush1.bf16.msra.mxu0 %v244
    %463 = vmatprep.subr.bf16.mxu0 0
    %464 = vmatpush1.bf16.msra.mxu0 %v245
    %465 = vmatprep.subr.bf16.mxu0 0
    %466 = vmatpush1.bf16.msra.mxu0 %v246
    %467 = vmatprep.subr.bf16.mxu0 0
    %468 = vmatpush1.bf16.msra.mxu0 %v247
    %469 = vmatprep.subr.bf16.mxu0 0
    %470 = vmatpush1.bf16.msra.mxu0 %v248
    %471 = vmatprep.subr.bf16.mxu0 0
    %472 = vmatpush1.bf16.msra.mxu0 %v249
    %473 = vmatprep.subr.bf16.mxu0 0
    %474 = vmatpush1.bf16.msra.mxu0 %v250
    %475 = vmatprep.subr.bf16.mxu0 0
    %476 = vmatpush1.bf16.msra.mxu0 0
    %477 = vmatprep.subr.bf16.mxu0 0
    %478 = vmatpush1.bf16.msra.mxu0 0
    %479 = vmatprep.subr.bf16.mxu0 0
    %480 = vmatpush1.bf16.msra.mxu0 0
    %481 = vmatprep.subr.bf16.mxu0 0
    %482 = vmatpush1.bf16.msra.mxu0 0
    %483 = vmatprep.subr.bf16.mxu0 0
    %484 = vmatpush1.bf16.msra.mxu0 0
    %485 = vmatprep.subr.bf16.mxu0 0
    %486 = vmatpush1.bf16.msra.mxu0 0
    %487 = vmatprep.subr.bf16.mxu0 0
    %488 = vmatpush1.bf16.msra.mxu0 0
    %489 = vmatprep.subr.bf16.mxu0 0
    %490 = vmatpush1.bf16.msra.mxu0 0
    %491 = vmatprep.mubr.bf16.mxu0 0
    %492 = vmatmul.mubr.bf16.gmra.mrb[0].mxu0 %v457
    %v493 = vpop.f32.mrb[0].mxu0
    %v494 = vadd.f32 %v447, %v493
    %v495 = vpop.f32.mrb[0].mxu0
    %v496 = vpop.f32.mrb[0].mxu0
    %v497 = vadd.f32 %v450, %v496
    %v498 = vpop.f32.mrb[0].mxu0
    %499 = vdwg.mxu0
    %500 = vst [vmem:[#allocation10 + $0x10] sm:$0xff] %v494
    %501 = vst [vmem:[#allocation10 + $0x30] sm:$0xff] %v497
    %v502 = vld [vmem:[#allocation2 + $0xc] sm:$0xf]
    %v503 = vld [vmem:[#allocation2 + $0x1c] sm:$0xf]
    %v504 = vld [vmem:[#allocation2 + $0x8] sm:$0xf]
    %v505 = vld [vmem:[#allocation2 + $0x18] sm:$0xf]
    %v508 = vunpack.c.l.b16 %v504
    %v509 = vunpack.c.l.b16 %v505
    %v510 = vpack.c.b16 %v509, %v508
    %512 = vmatprep.subr.bf16.mxu0 0
    %513 = vmatpush1.bf16.msra.mxu0 %v148
    %514 = vmatprep.subr.bf16.mxu0 0
    %515 = vmatpush1.bf16.msra.mxu0 %v149
    %516 = vmatprep.subr.bf16.mxu0 0
    %517 = vmatpush1.bf16.msra.mxu0 %v150
    %518 = vmatprep.subr.bf16.mxu0 0
    %519 = vmatpush1.bf16.msra.mxu0 %v151
    %520 = vmatprep.subr.bf16.mxu0 0
    %521 = vmatpush1.bf16.msra.mxu0 %v152
    %522 = vmatprep.subr.bf16.mxu0 0
    %523 = vmatpush1.bf16.msra.mxu0 %v153
    %524 = vmatprep.subr.bf16.mxu0 0
    %525 = vmatpush1.bf16.msra.mxu0 %v154
    %526 = vmatprep.subr.bf16.mxu0 0
    %527 = vmatpush1.bf16.msra.mxu0 %v155
    %528 = vmatprep.subr.bf16.mxu0 0
    %529 = vmatpush1.bf16.msra.mxu0 0
    %530 = vmatprep.subr.bf16.mxu0 0
    %531 = vmatpush1.bf16.msra.mxu0 0
    %532 = vmatprep.subr.bf16.mxu0 0
    %533 = vmatpush1.bf16.msra.mxu0 0
    %534 = vmatprep.subr.bf16.mxu0 0
    %535 = vmatpush1.bf16.msra.mxu0 0
    %536 = vmatprep.subr.bf16.mxu0 0
    %537 = vmatpush1.bf16.msra.mxu0 0
    %538 = vmatprep.subr.bf16.mxu0 0
    %539 = vmatpush1.bf16.msra.mxu0 0
    %540 = vmatprep.subr.bf16.mxu0 0
    %541 = vmatpush1.bf16.msra.mxu0 0
    %542 = vmatprep.subr.bf16.mxu0 0
    %543 = vmatpush1.bf16.msra.mxu0 0
    %544 = vmatprep.mubr.bf16.mxu0 0
    %545 = vmatmul.mubr.bf16.gmra.mrb[0].mxu0 %v510
    %v546 = vpop.f32.mrb[0].mxu0
    %v547 = vadd.f32 0.0, %v546
    %v548 = vpop.f32.mrb[0].mxu0
    %v549 = vpop.f32.mrb[0].mxu0
    %v550 = vadd.f32 0.0, %v549
    %v551 = vpop.f32.mrb[0].mxu0
    %552 = vdwg.mxu0
    %v555 = vunpack.c.l.b16 %v502
    %v556 = vunpack.c.l.b16 %v503
    %v557 = vpack.c.b16 %v556, %v555
    %559 = vmatprep.subr.bf16.mxu0 0
    %560 = vmatpush1.bf16.msra.mxu0 %v243
    %561 = vmatprep.subr.bf16.mxu0 0
    %562 = vmatpush1.bf16.msra.mxu0 %v244
    %563 = vmatprep.subr.bf16.mxu0 0
    %564 = vmatpush1.bf16.msra.mxu0 %v245
    %565 = vmatprep.subr.bf16.mxu0 0
    %566 = vmatpush1.bf16.msra.mxu0 %v246
    %567 = vmatprep.subr.bf16.mxu0 0
    %568 = vmatpush1.bf16.msra.mxu0 %v247
    %569 = vmatprep.subr.bf16.mxu0 0
    %570 = vmatpush1.bf16.msra.mxu0 %v248
    %571 = vmatprep.subr.bf16.mxu0 0
    %572 = vmatpush1.bf16.msra.mxu0 %v249
    %573 = vmatprep.subr.bf16.mxu0 0
    %574 = vmatpush1.bf16.msra.mxu0 %v250
    %575 = vmatprep.subr.bf16.mxu0 0
    %576 = vmatpush1.bf16.msra.mxu0 0
    %577 = vmatprep.subr.bf16.mxu0 0
    %578 = vmatpush1.bf16.msra.mxu0 0
    %579 = vmatprep.subr.bf16.mxu0 0
    %580 = vmatpush1.bf16.msra.mxu0 0
    %581 = vmatprep.subr.bf16.mxu0 0
    %582 = vmatpush1.bf16.msra.mxu0 0
    %583 = vmatprep.subr.bf16.mxu0 0
    %584 = vmatpush1.bf16.msra.mxu0 0
    %585 = vmatprep.subr.bf16.mxu0 0
    %586 = vmatpush1.bf16.msra.mxu0 0
    %587 = vmatprep.subr.bf16.mxu0 0
    %588 = vmatpush1.bf16.msra.mxu0 0
    %589 = vmatprep.subr.bf16.mxu0 0
    %590 = vmatpush1.bf16.msra.mxu0 0
    %591 = vmatprep.mubr.bf16.mxu0 0
    %592 = vmatmul.mubr.bf16.gmra.mrb[0].mxu0 %v557
    %v593 = vpop.f32.mrb[0].mxu0
    %v594 = vadd.f32 %v547, %v593
    %v595 = vpop.f32.mrb[0].mxu0
    %v596 = vpop.f32.mrb[0].mxu0
    %v597 = vadd.f32 %v550, %v596
    %v598 = vpop.f32.mrb[0].mxu0
    %599 = vdwg.mxu0
    %600 = vst [vmem:[#allocation10 + $0x18] sm:$0xff] %v594
    %601 = vst [vmem:[#allocation10 + $0x38] sm:$0xff] %v597
    // Predicated region
    $region34: #{tpu_custom_call.1} parent=1 // pred_check
      _
    $region35: #{tpu_custom_call.1} parent=1 // pred_check_branch
      %603 = sbr.rel (0) target = $region37
    $region36: #{tpu_custom_call.1} parent=1 // pred_region
      %s605 = ssub.s32 1024, 1024
      %606 = vsyncadd [#allocation4], %s605
      %s607 = sshll.u32 [#allocation10], 4
      %s608 = int_to_ptr.vmem [resolvable:$true] %s607
      %613 = dma.vmem_to_hbm [thread:$0]  %s608, 1024, %s4, [#allocation4], 512, 512, 32
    $region37: #{tpu_custom_call.1} parent=1 // pred_fallthru
      _
    // Predicated region
    $region38: #{tpu_custom_call.1} parent=1 // pred_check
      _
    $region39: #{tpu_custom_call.1} parent=1 // pred_check_branch
      %615 = sbr.rel (0) target = $region41
    $region40: #{tpu_custom_call.1} parent=1 // pred_region
      %616 = dma.done [#allocation4], 1024
    $region41: #{tpu_custom_call.1} parent=1 // pred_fallthru
      _
    %617 = vsyncpa [#allocation3], 1
    %618 = vsyncpa [#allocation6], 1
    %619 = vsyncpa [#allocation9], 1
    %620 = vsyncpa [#allocation4], 1

// kernel: tpu_custom_call.1
$region0: #{tpu_custom_call.1}
  #allocation0 [shape = 'u32[]', space=smem, size = 0x4, offset = 0x4, fixed_abs, tag = 'smem constant byte address 0x4 - core index']
  #allocation1 [shape = 'u32[144,128]{1,0:T(1,128)}', space=vmem, size = 0x12000, scoped, tag = 'internal scratch']
  %s0 = inlined_call_operand.hbm [shape: bf16[16,512], index: 0, kind: input, shape index: {}]
  %s1 = inlined_call_operand.hbm [shape: bf16[16,128], index: 1, kind: input, shape index: {}]
  %s2 = inlined_call_operand.hbm [shape: bf16[128,128], index: 2, kind: input, shape index: {}]
  %s3 = inlined_call_operand.hbm [shape: bf16[128,128], index: 3, kind: input, shape index: {}]
  %s4 = inlined_call_operand.hbm [shape: f32[16,512], index: 4, kind: output, shape index: {}]
  %s5 = sld [smem:[#allocation0]]
  $region42: #{tpu_custom_call.1} parent=0
    _
  %s7 = ssub.s32 1, %s5
  %s8 = scalar_select 0, %s7, %s5
  $region1: #{tpu_custom_call.1} parent=0
    #allocation2 [shape = 'u8[16384]{0}', space=vmem, size = 0x4000, scoped, tag = 'input window, operand 0, single buffered']
    #allocation3 [shape = 's32[1]{0}', space=sflag, size = 0x4, scoped, tag = 'scoped memory for tpu_custom_call.1']
    #allocation4 [shape = 's32[1]{0}', space=sflag, size = 0x4, scoped, tag = 'scoped memory for tpu_custom_call.1']
    #allocation5 [shape = 'u8[4096]{0}', space=vmem, size = 0x1000, scoped, tag = 'input window, operand 1, single buffered']
    #allocation6 [shape = 's32[1]{0}', space=sflag, size = 0x4, scoped, tag = 'scoped memory for tpu_custom_call.1']
    #allocation7 [shape = 'u8[32768]{0}', space=vmem, size = 0x8000, scoped, tag = 'input window, operand 2, single buffered']
    #allocation8 [shape = 'u8[32768]{0}', space=vmem, size = 0x8000, scoped, tag = 'input window, operand 3, single buffered']
    #allocation9 [shape = 's32[1]{0}', space=sflag, size = 0x4, scoped, tag = 'scoped memory for tpu_custom_call.1']
    #allocation10 [shape = 'u8[32768]{0}', space=vmem, size = 0x8000, scoped, tag = 'output window, operand 0, single buffered']
    %9 = vsyncpa [#allocation3], 0
    %10 = vsyncpa [#allocation6], 0
    %11 = vsyncpa [#allocation9], 0
    %12 = vsyncpa [#allocation4], 0
    // Predicated region
    $region2: #{tpu_custom_call.1} parent=1 // pred_check
      _
    $region3: #{tpu_custom_call.1} parent=1 // pred_check_branch
      %14 = sbr.rel (0) target = $region5
    $region4: #{tpu_custom_call.1} parent=1 // pred_region
      %s16 = ssub.s32 512, 512
      %17 = vsyncadd [#allocation3], %s16
      %s18 = sshll.u32 [#allocation2], 4
      %s19 = int_to_ptr.vmem [resolvable:$true] %s18
      %24 = dma.hbm_to_vmem [thread:$0]  %s0, 512, %s19, [#allocation3], 256, 256, 16
    $region5: #{tpu_custom_call.1} parent=1 // pred_fallthru
      _
    // Predicated region
    $region6: #{tpu_custom_call.1} parent=1 // pred_check
      _
    $region7: #{tpu_custom_call.1} parent=1 // pred_check_branch
      %26 = sbr.rel (0) target = $region9
    $region8: #{tpu_custom_call.1} parent=1 // pred_region
      %s28 = ssub.s32 128, 128
      %29 = vsyncadd [#allocation6], %s28
      %s30 = sshll.u32 [#allocation5], 4
      %s31 = int_to_ptr.vmem [resolvable:$true] %s30
      %36 = dma.hbm_to_vmem [thread:$0]  %s1, 128, %s31, [#allocation6], 64, 64, 4
    $region9: #{tpu_custom_call.1} parent=1 // pred_fallthru
      _
    // Predicated region
    $region10: #{tpu_custom_call.1} parent=1 // pred_check
      _
    $region11: #{tpu_custom_call.1} parent=1 // pred_check_branch
      %38 = sbr.rel (0) target = $region13
    $region12: #{tpu_custom_call.1} parent=1 // pred_region
      %s40 = ssub.s32 1024, 1024
      %41 = vsyncadd [#allocation6], %s40
      %s42 = sshll.u32 [#allocation7], 4
      %s43 = int_to_ptr.vmem [resolvable:$true] %s42
      %48 = dma.hbm_to_vmem [thread:$0]  %s2, 1024, %s43, [#allocation6], 64, 64, 4
    $region13: #{tpu_custom_call.1} parent=1 // pred_fallthru
      _
    // Predicated region
    $region14: #{tpu_custom_call.1} parent=1 // pred_check
      _
    $region15: #{tpu_custom_call.1} parent=1 // pred_check_branch
      %50 = sbr.rel (0) target = $region17
    $region16: #{tpu_custom_call.1} parent=1 // pred_region
      %s52 = ssub.s32 1024, 1024
      %53 = vsyncadd [#allocation9], %s52
      %s54 = sshll.u32 [#allocation8], 4
      %s55 = int_to_ptr.vmem [resolvable:$true] %s54
      %60 = dma.hbm_to_vmem [thread:$0]  %s3, 1024, %s55, [#allocation9], 64, 64, 4
    $region17: #{tpu_custom_call.1} parent=1 // pred_fallthru
      _
    // Predicated region
    $region18: #{tpu_custom_call.1} parent=1 // pred_check
      _
    $region19: #{tpu_custom_call.1} parent=1 // pred_check_branch
      %62 = sbr.rel (0) target = $region21
    $region20: #{tpu_custom_call.1} parent=1 // pred_region
      %63 = dma.done [#allocation3], 512
    $region21: #{tpu_custom_call.1} parent=1 // pred_fallthru
      _
    // Predicated region
    $region22: #{tpu_custom_call.1} parent=1 // pred_check
      _
    $region23: #{tpu_custom_call.1} parent=1 // pred_check_branch
      %65 = sbr.rel (0) target = $region25
    $region24: #{tpu_custom_call.1} parent=1 // pred_region
      %66 = dma.done [#allocation6], 128
    $region25: #{tpu_custom_call.1} parent=1 // pred_fallthru
      _
    // Predicated region
    $region26: #{tpu_custom_call.1} parent=1 // pred_check
      _
    $region27: #{tpu_custom_call.1} parent=1 // pred_check_branch
      %68 = sbr.rel (0) target = $region29
    $region28: #{tpu_custom_call.1} parent=1 // pred_region
      %69 = dma.done [#allocation6], 1024
    $region29: #{tpu_custom_call.1} parent=1 // pred_fallthru
      _
    // Predicated region
    $region30: #{tpu_custom_call.1} parent=1 // pred_check
      _
    $region31: #{tpu_custom_call.1} parent=1 // pred_check_branch
      %71 = sbr.rel (0) target = $region33
    $region32: #{tpu_custom_call.1} parent=1 // pred_region
      %72 = dma.done [#allocation9], 1024
    $region33: #{tpu_custom_call.1} parent=1 // pred_fallthru
      _
    %v74 = vld [vmem:[#allocation7] sm:$0xf]
    %v75 = vld [vmem:[#allocation7 + $0x4] sm:$0xf]
    %v76 = vld [vmem:[#allocation7 + $0x8] sm:$0xf]
    %v77 = vld [vmem:[#allocation7 + $0xc] sm:$0xf]
    %v78 = vld [vmem:[#allocation7 + $0x10] sm:$0xf]
    %v79 = vld [vmem:[#allocation7 + $0x14] sm:$0xf]
    %v80 = vld [vmem:[#allocation7 + $0x18] sm:$0xf]
    %v81 = vld [vmem:[#allocation7 + $0x1c] sm:$0xf]
    %v82 = vld [vmem:[#allocation7 + $0x20] sm:$0xf]
    %v83 = vld [vmem:[#allocation7 + $0x24] sm:$0xf]
    %v84 = vld [vmem:[#allocation7 + $0x28] sm:$0xf]
    %v85 = vld [vmem:[#allocation7 + $0x2c] sm:$0xf]
    %v86 = vld [vmem:[#allocation7 + $0x30] sm:$0xf]
    %v87 = vld [vmem:[#allocation7 + $0x34] sm:$0xf]
    %v88 = vld [vmem:[#allocation7 + $0x38] sm:$0xf]
    %v89 = vld [vmem:[#allocation7 + $0x3c] sm:$0xf]
    %v90 = vld [vmem:[#allocation8] sm:$0xf]
    %v91 = vld [vmem:[#allocation8 + $0x4] sm:$0xf]
    %v92 = vld [vmem:[#allocation8 + $0x8] sm:$0xf]
    %v93 = vld [vmem:[#allocation8 + $0xc] sm:$0xf]
    %v94 = vld [vmem:[#allocation8 + $0x10] sm:$0xf]
    %v95 = vld [vmem:[#allocation8 + $0x14] sm:$0xf]
    %v96 = vld [vmem:[#allocation8 + $0x18] sm:$0xf]
    %v97 = vld [vmem:[#allocation8 + $0x1c] sm:$0xf]
    %v98 = vld [vmem:[#allocation8 + $0x20] sm:$0xf]
    %v99 = vld [vmem:[#allocation8 + $0x24] sm:$0xf]
    %v100 = vld [vmem:[#allocation8 + $0x28] sm:$0xf]
    %v101 = vld [vmem:[#allocation8 + $0x2c] sm:$0xf]
    %v102 = vld [vmem:[#allocation8 + $0x30] sm:$0xf]
    %v103 = vld [vmem:[#allocation8 + $0x34] sm:$0xf]
    %v104 = vld [vmem:[#allocation8 + $0x38] sm:$0xf]
    %v105 = vld [vmem:[#allocation8 + $0x3c] sm:$0xf]
    %v106 = vld [vmem:[#allocation2] sm:$0xf]
    %v107 = vld [vmem:[#allocation2 + $0x10] sm:$0xf]
    %v108 = vld [vmem:[#allocation5] sm:$0xf]
    %v109 = vld [vmem:[#allocation5 + $0x4] sm:$0xf]
    %v112 = vunpack.c.l.b16 %v108
    %v113 = vunpack.c.l.b16 %v109
    %v114 = vpack.c.b16 %v113, %v112
    %v132 = vunpack.c.l.b16 %v90
    %v133 = vunpack.c.l.b16 %v91
    %v134 = vunpack.c.l.b16 %v92
    %v135 = vunpack.c.l.b16 %v93
    %v136 = vunpack.c.l.b16 %v94
    %v137 = vunpack.c.l.b16 %v95
    %v138 = vunpack.c.l.b16 %v96
    %v139 = vunpack.c.l.b16 %v97
    %v140 = vunpack.c.l.b16 %v98
    %v141 = vunpack.c.l.b16 %v99
    %v142 = vunpack.c.l.b16 %v100
    %v143 = vunpack.c.l.b16 %v101
    %v144 = vunpack.c.l.b16 %v102
    %v145 = vunpack.c.l.b16 %v103
    %v146 = vunpack.c.l.b16 %v104
    %v147 = vunpack.c.l.b16 %v105
    %v148 = vpack.c.b16 %v133, %v132
    %v149 = vpack.c.b16 %v135, %v134
    %v150 = vpack.c.b16 %v137, %v136
    %v151 = vpack.c.b16 %v139, %v138
    %v152 = vpack.c.b16 %v141, %v140
    %v153 = vpack.c.b16 %v143, %v142
    %v154 = vpack.c.b16 %v145, %v144
    %v155 = vpack.c.b16 %v147, %v146
    %164 = vmatprep.subr.bf16.mxu0 0
    %165 = vmatpush1.bf16.msra.mxu0 %v148
    %166 = vmatprep.subr.bf16.mxu0 0
    %167 = vmatpush1.bf16.msra.mxu0 %v149
    %168 = vmatprep.subr.bf16.mxu0 0
    %169 = vmatpush1.bf16.msra.mxu0 %v150
    %170 = vmatprep.subr.bf16.mxu0 0
    %171 = vmatpush1.bf16.msra.mxu0 %v151
    %172 = vmatprep.subr.bf16.mxu0 0
    %173 = vmatpush1.bf16.msra.mxu0 %v152
    %174 = vmatprep.subr.bf16.mxu0 0
    %175 = vmatpush1.bf16.msra.mxu0 %v153
    %176 = vmatprep.subr.bf16.mxu0 0
    %177 = vmatpush1.bf16.msra.mxu0 %v154
    %178 = vmatprep.subr.bf16.mxu0 0
    %179 = vmatpush1.bf16.msra.mxu0 %v155
    %180 = vmatprep.subr.bf16.mxu0 0
    %181 = vmatpush1.bf16.msra.mxu0 0
    %182 = vmatprep.subr.bf16.mxu0 0
    %183 = vmatpush1.bf16.msra.mxu0 0
    %184 = vmatprep.subr.bf16.mxu0 0
    %185 = vmatpush1.bf16.msra.mxu0 0
    %186 = vmatprep.subr.bf16.mxu0 0
    %187 = vmatpush1.bf16.msra.mxu0 0
    %188 = vmatprep.subr.bf16.mxu0 0
    %189 = vmatpush1.bf16.msra.mxu0 0
    %190 = vmatprep.subr.bf16.mxu0 0
    %191 = vmatpush1.bf16.msra.mxu0 0
    %192 = vmatprep.subr.bf16.mxu0 0
    %193 = vmatpush1.bf16.msra.mxu0 0
    %194 = vmatprep.subr.bf16.mxu0 0
    %195 = vmatpush1.bf16.msra.mxu0 0
    %196 = vmatprep.mubr.bf16.mxu0 0
    %197 = vmatmul.mubr.bf16.gmra.mrb[0].mxu0 %v114
    %v198 = vpop.f32.mrb[0].mxu0
    %v199 = vadd.f32 0.0, %v198
    %v200 = vpop.f32.mrb[0].mxu0
    %v201 = vpop.f32.mrb[0].mxu0
    %v202 = vadd.f32 0.0, %v201
    %v203 = vpop.f32.mrb[0].mxu0
    %204 = vdwg.mxu0
    %v207 = vunpack.c.l.b16 %v106
    %v208 = vunpack.c.l.b16 %v107
    %v209 = vpack.c.b16 %v208, %v207
    %v227 = vunpack.c.l.b16 %v74
    %v228 = vunpack.c.l.b16 %v75
    %v229 = vunpack.c.l.b16 %v76
    %v230 = vunpack.c.l.b16 %v77
    %v231 = vunpack.c.l.b16 %v78
    %v232 = vunpack.c.l.b16 %v79
    %v233 = vunpack.c.l.b16 %v80
    %v234 = vunpack.c.l.b16 %v81
    %v235 = vunpack.c.l.b16 %v82
    %v236 = vunpack.c.l.b16 %v83
    %v237 = vunpack.c.l.b16 %v84
    %v238 = vunpack.c.l.b16 %v85
    %v239 = vunpack.c.l.b16 %v86
    %v240 = vunpack.c.l.b16 %v87
    %v241 = vunpack.c.l.b16 %v88
    %v242 = vunpack.c.l.b16 %v89
    %v243 = vpack.c.b16 %v228, %v227
    %v244 = vpack.c.b16 %v230, %v229
    %v245 = vpack.c.b16 %v232, %v231
    %v246 = vpack.c.b16 %v234, %v233
    %v247 = vpack.c.b16 %v236, %v235
    %v248 = vpack.c.b16 %v238, %v237
    %v249 = vpack.c.b16 %v240, %v239
    %v250 = vpack.c.b16 %v242, %v241
    %259 = vmatprep.subr.bf16.mxu0 0
    %260 = vmatpush1.bf16.msra.mxu0 %v243
    %261 = vmatprep.subr.bf16.mxu0 0
    %262 = vmatpush1.bf16.msra.mxu0 %v244
    %263 = vmatprep.subr.bf16.mxu0 0
    %264 = vmatpush1.bf16.msra.mxu0 %v245
    %265 = vmatprep.subr.bf16.mxu0 0
    %266 = vmatpush1.bf16.msra.mxu0 %v246
    %267 = vmatprep.subr.bf16.mxu0 0
    %268 = vmatpush1.bf16.msra.mxu0 %v247
    %269 = vmatprep.subr.bf16.mxu0 0
    %270 = vmatpush1.bf16.msra.mxu0 %v248
    %271 = vmatprep.subr.bf16.mxu0 0
    %272 = vmatpush1.bf16.msra.mxu0 %v249
    %273 = vmatprep.subr.bf16.mxu0 0
    %274 = vmatpush1.bf16.msra.mxu0 %v250
    %275 = vmatprep.subr.bf16.mxu0 0
    %276 = vmatpush1.bf16.msra.mxu0 0
    %277 = vmatprep.subr.bf16.mxu0 0
    %278 = vmatpush1.bf16.msra.mxu0 0
    %279 = vmatprep.subr.bf16.mxu0 0
    %280 = vmatpush1.bf16.msra.mxu0 0
    %281 = vmatprep.subr.bf16.mxu0 0
    %282 = vmatpush1.bf16.msra.mxu0 0
    %283 = vmatprep.subr.bf16.mxu0 0
    %284 = vmatpush1.bf16.msra.mxu0 0
    %285 = vmatprep.subr.bf16.mxu0 0
    %286 = vmatpush1.bf16.msra.mxu0 0
    %287 = vmatprep.subr.bf16.mxu0 0
    %288 = vmatpush1.bf16.msra.mxu0 0
    %289 = vmatprep.subr.bf16.mxu0 0
    %290 = vmatpush1.bf16.msra.mxu0 0
    %291 = vmatprep.mubr.bf16.mxu0 0
    %292 = vmatmul.mubr.bf16.gmra.mrb[0].mxu0 %v209
    %v293 = vpop.f32.mrb[0].mxu0
    %v294 = vadd.f32 %v199, %v293
    %v295 = vpop.f32.mrb[0].mxu0
    %v296 = vpop.f32.mrb[0].mxu0
    %v297 = vadd.f32 %v202, %v296
    %v298 = vpop.f32.mrb[0].mxu0
    %299 = vdwg.mxu0
    %300 = vst [vmem:[#allocation10] sm:$0xff] %v294
    %301 = vst [vmem:[#allocation10 + $0x20] sm:$0xff] %v297
    %v302 = vld [vmem:[#allocation2 + $0x4] sm:$0xf]
    %v303 = vld [vmem:[#allocation2 + $0x14] sm:$0xf]
    %v304 = vld [vmem:[#allocation2] sm:$0xf]
    %v305 = vld [vmem:[#allocation2 + $0x10] sm:$0xf]
    %v308 = vunpack.c.l.b16 %v304
    %v309 = vunpack.c.l.b16 %v305
    %v310 = vpack.c.b16 %v309, %v308
    %312 = vmatprep.subr.bf16.mxu0 0
    %313 = vmatpush1.bf16.msra.mxu0 %v148
    %314 = vmatprep.subr.bf16.mxu0 0
    %315 = vmatpush1.bf16.msra.mxu0 %v149
    %316 = vmatprep.subr.bf16.mxu0 0
    %317 = vmatpush1.bf16.msra.mxu0 %v150
    %318 = vmatprep.subr.bf16.mxu0 0
    %319 = vmatpush1.bf16.msra.mxu0 %v151
    %320 = vmatprep.subr.bf16.mxu0 0
    %321 = vmatpush1.bf16.msra.mxu0 %v152
    %322 = vmatprep.subr.bf16.mxu0 0
    %323 = vmatpush1.bf16.msra.mxu0 %v153
    %324 = vmatprep.subr.bf16.mxu0 0
    %325 = vmatpush1.bf16.msra.mxu0 %v154
    %326 = vmatprep.subr.bf16.mxu0 0
    %327 = vmatpush1.bf16.msra.mxu0 %v155
    %328 = vmatprep.subr.bf16.mxu0 0
    %329 = vmatpush1.bf16.msra.mxu0 0
    %330 = vmatprep.subr.bf16.mxu0 0
    %331 = vmatpush1.bf16.msra.mxu0 0
    %332 = vmatprep.subr.bf16.mxu0 0
    %333 = vmatpush1.bf16.msra.mxu0 0
    %334 = vmatprep.subr.bf16.mxu0 0
    %335 = vmatpush1.bf16.msra.mxu0 0
    %336 = vmatprep.subr.bf16.mxu0 0
    %337 = vmatpush1.bf16.msra.mxu0 0
    %338 = vmatprep.subr.bf16.mxu0 0
    %339 = vmatpush1.bf16.msra.mxu0 0
    %340 = vmatprep.subr.bf16.mxu0 0
    %341 = vmatpush1.bf16.msra.mxu0 0
    %342 = vmatprep.subr.bf16.mxu0 0
    %343 = vmatpush1.bf16.msra.mxu0 0
    %344 = vmatprep.mubr.bf16.mxu0 0
    %345 = vmatmul.mubr.bf16.gmra.mrb[0].mxu0 %v310
    %v346 = vpop.f32.mrb[0].mxu0
    %v347 = vadd.f32 0.0, %v346
    %v348 = vpop.f32.mrb[0].mxu0
    %v349 = vpop.f32.mrb[0].mxu0
    %v350 = vadd.f32 0.0, %v349
    %v351 = vpop.f32.mrb[0].mxu0
    %352 = vdwg.mxu0
    %v355 = vunpack.c.l.b16 %v302
    %v356 = vunpack.c.l.b16 %v303
    %v357 = vpack.c.b16 %v356, %v355
    %359 = vmatprep.subr.bf16.mxu0 0
    %360 = vmatpush1.bf16.msra.mxu0 %v243
    %361 = vmatprep.subr.bf16.mxu0 0
    %362 = vmatpush1.bf16.msra.mxu0 %v244
    %363 = vmatprep.subr.bf16.mxu0 0
    %364 = vmatpush1.bf16.msra.mxu0 %v245
    %365 = vmatprep.subr.bf16.mxu0 0
    %366 = vmatpush1.bf16.msra.mxu0 %v246
    %367 = vmatprep.subr.bf16.mxu0 0
    %368 = vmatpush1.bf16.msra.mxu0 %v247
    %369 = vmatprep.subr.bf16.mxu0 0
    %370 = vmatpush1.bf16.msra.mxu0 %v248
    %371 = vmatprep.subr.bf16.mxu0 0
    %372 = vmatpush1.bf16.msra.mxu0 %v249
    %373 = vmatprep.subr.bf16.mxu0 0
    %374 = vmatpush1.bf16.msra.mxu0 %v250
    %375 = vmatprep.subr.bf16.mxu0 0
    %376 = vmatpush1.bf16.msra.mxu0 0
    %377 = vmatprep.subr.bf16.mxu0 0
    %378 = vmatpush1.bf16.msra.mxu0 0
    %379 = vmatprep.subr.bf16.mxu0 0
    %380 = vmatpush1.bf16.msra.mxu0 0
    %381 = vmatprep.subr.bf16.mxu0 0
    %382 = vmatpush1.bf16.msra.mxu0 0
    %383 = vmatprep.subr.bf16.mxu0 0
    %384 = vmatpush1.bf16.msra.mxu0 0
    %385 = vmatprep.subr.bf16.mxu0 0
    %386 = vmatpush1.bf16.msra.mxu0 0
    %387 = vmatprep.subr.bf16.mxu0 0
    %388 = vmatpush1.bf16.msra.mxu0 0
    %389 = vmatprep.subr.bf16.mxu0 0
    %390 = vmatpush1.bf16.msra.mxu0 0
    %391 = vmatprep.mubr.bf16.mxu0 0
    %392 = vmatmul.mubr.bf16.gmra.mrb[0].mxu0 %v357
    %v393 = vpop.f32.mrb[0].mxu0
    %v394 = vadd.f32 %v347, %v393
    %v395 = vpop.f32.mrb[0].mxu0
    %v396 = vpop.f32.mrb[0].mxu0
    %v397 = vadd.f32 %v350, %v396
    %v398 = vpop.f32.mrb[0].mxu0
    %399 = vdwg.mxu0
    %400 = vst [vmem:[#allocation10 + $0x8] sm:$0xff] %v394
    %401 = vst [vmem:[#allocation10 + $0x28] sm:$0xff] %v397
    %v402 = vld [vmem:[#allocation2 + $0x8] sm:$0xf]
    %v403 = vld [vmem:[#allocation2 + $0x18] sm:$0xf]
    %v404 = vld [vmem:[#allocation2 + $0x4] sm:$0xf]
    %v405 = vld [vmem:[#allocation2 + $0x14] sm:$0xf]
    %v408 = vunpack.c.l.b16 %v404
    %v409 = vunpack.c.l.b16 %v405
    %v410 = vpack.c.b16 %v409, %v408
    %412 = vmatprep.subr.bf16.mxu0 0
    %413 = vmatpush1.bf16.msra.mxu0 %v148
    %414 = vmatprep.subr.bf16.mxu0 0
    %415 = vmatpush1.bf16.msra.mxu0 %v149
    %416 = vmatprep.subr.bf16.mxu0 0
    %417 = vmatpush1.bf16.msra.mxu0 %v150
    %418 = vmatprep.subr.bf16.mxu0 0
    %419 = vmatpush1.bf16.msra.mxu0 %v151
    %420 = vmatprep.subr.bf16.mxu0 0
    %421 = vmatpush1.bf16.msra.mxu0 %v152
    %422 = vmatprep.subr.bf16.mxu0 0
    %423 = vmatpush1.bf16.msra.mxu0 %v153
    %424 = vmatprep.subr.bf16.mxu0 0
    %425 = vmatpush1.bf16.msra.mxu0 %v154
    %426 = vmatprep.subr.bf16.mxu0 0
    %427 = vmatpush1.bf16.msra.mxu0 %v155
    %428 = vmatprep.subr.bf16.mxu0 0
    %429 = vmatpush1.bf16.msra.mxu0 0
    %430 = vmatprep.subr.bf16.mxu0 0
    %431 = vmatpush1.bf16.msra.mxu0 0
    %432 = vmatprep.subr.bf16.mxu0 0
    %433 = vmatpush1.bf16.msra.mxu0 0
    %434 = vmatprep.subr.bf16.mxu0 0
    %435 = vmatpush1.bf16.msra.mxu0 0
    %436 = vmatprep.subr.bf16.mxu0 0
    %437 = vmatpush1.bf16.msra.mxu0 0
    %438 = vmatprep.subr.bf16.mxu0 0
    %439 = vmatpush1.bf16.msra.mxu0 0
    %440 = vmatprep.subr.bf16.mxu0 0
    %441 = vmatpush1.bf16.msra.mxu0 0
    %442 = vmatprep.subr.bf16.mxu0 0
    %443 = vmatpush1.bf16.msra.mxu0 0
    %444 = vmatprep.mubr.bf16.mxu0 0
    %445 = vmatmul.mubr.bf16.gmra.mrb[0].mxu0 %v410
    %v446 = vpop.f32.mrb[0].mxu0
    %v447 = vadd.f32 0.0, %v446
    %v448 = vpop.f32.mrb[0].mxu0
    %v449 = vpop.f32.mrb[0].mxu0
    %v450 = vadd.f32 0.0, %v449
    %v451 = vpop.f32.mrb[0].mxu0
    %452 = vdwg.mxu0
    %v455 = vunpack.c.l.b16 %v402
    %v456 = vunpack.c.l.b16 %v403
    %v457 = vpack.c.b16 %v456, %v455
    %459 = vmatprep.subr.bf16.mxu0 0
    %460 = vmatpush1.bf16.msra.mxu0 %v243
    %461 = vmatprep.subr.bf16.mxu0 0
    %462 = vmatpush1.bf16.msra.mxu0 %v244
    %463 = vmatprep.subr.bf16.mxu0 0
    %464 = vmatpush1.bf16.msra.mxu0 %v245
    %465 = vmatprep.subr.bf16.mxu0 0
    %466 = vmatpush1.bf16.msra.mxu0 %v246
    %467 = vmatprep.subr.bf16.mxu0 0
    %468 = vmatpush1.bf16.msra.mxu0 %v247
    %469 = vmatprep.subr.bf16.mxu0 0
    %470 = vmatpush1.bf16.msra.mxu0 %v248
    %471 = vmatprep.subr.bf16.mxu0 0
    %472 = vmatpush1.bf16.msra.mxu0 %v249
    %473 = vmatprep.subr.bf16.mxu0 0
    %474 = vmatpush1.bf16.msra.mxu0 %v250
    %475 = vmatprep.subr.bf16.mxu0 0
    %476 = vmatpush1.bf16.msra.mxu0 0
    %477 = vmatprep.subr.bf16.mxu0 0
    %478 = vmatpush1.bf16.msra.mxu0 0
    %479 = vmatprep.subr.bf16.mxu0 0
    %480 = vmatpush1.bf16.msra.mxu0 0
    %481 = vmatprep.subr.bf16.mxu0 0
    %482 = vmatpush1.bf16.msra.mxu0 0
    %483 = vmatprep.subr.bf16.mxu0 0
    %484 = vmatpush1.bf16.msra.mxu0 0
    %485 = vmatprep.subr.bf16.mxu0 0
    %486 = vmatpush1.bf16.msra.mxu0 0
    %487 = vmatprep.subr.bf16.mxu0 0
    %488 = vmatpush1.bf16.msra.mxu0 0
    %489 = vmatprep.subr.bf16.mxu0 0
    %490 = vmatpush1.bf16.msra.mxu0 0
    %491 = vmatprep.mubr.bf16.mxu0 0
    %492 = vmatmul.mubr.bf16.gmra.mrb[0].mxu0 %v457
    %v493 = vpop.f32.mrb[0].mxu0
    %v494 = vadd.f32 %v447, %v493
    %v495 = vpop.f32.mrb[0].mxu0
    %v496 = vpop.f32.mrb[0].mxu0
    %v497 = vadd.f32 %v450, %v496
    %v498 = vpop.f32.mrb[0].mxu0
    %499 = vdwg.mxu0
    %500 = vst [vmem:[#allocation10 + $0x10] sm:$0xff] %v494
    %501 = vst [vmem:[#allocation10 + $0x30] sm:$0xff] %v497
    %v502 = vld [vmem:[#allocation2 + $0xc] sm:$0xf]
    %v503 = vld [vmem:[#allocation2 + $0x1c] sm:$0xf]
    %v504 = vld [vmem:[#allocation2 + $0x8] sm:$0xf]
    %v505 = vld [vmem:[#allocation2 + $0x18] sm:$0xf]
    %v508 = vunpack.c.l.b16 %v504
    %v509 = vunpack.c.l.b16 %v505
    %v510 = vpack.c.b16 %v509, %v508
    %512 = vmatprep.subr.bf16.mxu0 0
    %513 = vmatpush1.bf16.msra.mxu0 %v148
    %514 = vmatprep.subr.bf16.mxu0 0
    %515 = vmatpush1.bf16.msra.mxu0 %v149
    %516 = vmatprep.subr.bf16.mxu0 0
    %517 = vmatpush1.bf16.msra.mxu0 %v150
    %518 = vmatprep.subr.bf16.mxu0 0
    %519 = vmatpush1.bf16.msra.mxu0 %v151
    %520 = vmatprep.subr.bf16.mxu0 0
    %521 = vmatpush1.bf16.msra.mxu0 %v152
    %522 = vmatprep.subr.bf16.mxu0 0
    %523 = vmatpush1.bf16.msra.mxu0 %v153
    %524 = vmatprep.subr.bf16.mxu0 0
    %525 = vmatpush1.bf16.msra.mxu0 %v154
    %526 = vmatprep.subr.bf16.mxu0 0
    %527 = vmatpush1.bf16.msra.mxu0 %v155
    %528 = vmatprep.subr.bf16.mxu0 0
    %529 = vmatpush1.bf16.msra.mxu0 0
    %530 = vmatprep.subr.bf16.mxu0 0
    %531 = vmatpush1.bf16.msra.mxu0 0
    %532 = vmatprep.subr.bf16.mxu0 0
    %533 = vmatpush1.bf16.msra.mxu0 0
    %534 = vmatprep.subr.bf16.mxu0 0
    %535 = vmatpush1.bf16.msra.mxu0 0
    %536 = vmatprep.subr.bf16.mxu0 0
    %537 = vmatpush1.bf16.msra.mxu0 0
    %538 = vmatprep.subr.bf16.mxu0 0
    %539 = vmatpush1.bf16.msra.mxu0 0
    %540 = vmatprep.subr.bf16.mxu0 0
    %541 = vmatpush1.bf16.msra.mxu0 0
    %542 = vmatprep.subr.bf16.mxu0 0
    %543 = vmatpush1.bf16.msra.mxu0 0
    %544 = vmatprep.mubr.bf16.mxu0 0
    %545 = vmatmul.mubr.bf16.gmra.mrb[0].mxu0 %v510
    %v546 = vpop.f32.mrb[0].mxu0
    %v547 = vadd.f32 0.0, %v546
    %v548 = vpop.f32.mrb[0].mxu0
    %v549 = vpop.f32.mrb[0].mxu0
    %v550 = vadd.f32 0.0, %v549
    %v551 = vpop.f32.mrb[0].mxu0
    %552 = vdwg.mxu0
    %v555 = vunpack.c.l.b16 %v502
    %v556 = vunpack.c.l.b16 %v503
    %v557 = vpack.c.b16 %v556, %v555
    %559 = vmatprep.subr.bf16.mxu0 0
    %560 = vmatpush1.bf16.msra.mxu0 %v243
    %561 = vmatprep.subr.bf16.mxu0 0
    %562 = vmatpush1.bf16.msra.mxu0 %v244
    %563 = vmatprep.subr.bf16.mxu0 0
    %564 = vmatpush1.bf16.msra.mxu0 %v245
    %565 = vmatprep.subr.bf16.mxu0 0
    %566 = vmatpush1.bf16.msra.mxu0 %v246
    %567 = vmatprep.subr.bf16.mxu0 0
    %568 = vmatpush1.bf16.msra.mxu0 %v247
    %569 = vmatprep.subr.bf16.mxu0 0
    %570 = vmatpush1.bf16.msra.mxu0 %v248
    %571 = vmatprep.subr.bf16.mxu0 0
    %572 = vmatpush1.bf16.msra.mxu0 %v249
    %573 = vmatprep.subr.bf16.mxu0 0
    %574 = vmatpush1.bf16.msra.mxu0 %v250
    %575 = vmatprep.subr.bf16.mxu0 0
    %576 = vmatpush1.bf16.msra.mxu0 0
    %577 = vmatprep.subr.bf16.mxu0 0
    %578 = vmatpush1.bf16.msra.mxu0 0
    %579 = vmatprep.subr.bf16.mxu0 0
    %580 = vmatpush1.bf16.msra.mxu0 0
    %581 = vmatprep.subr.bf16.mxu0 0
    %582 = vmatpush1.bf16.msra.mxu0 0
    %583 = vmatprep.subr.bf16.mxu0 0
    %584 = vmatpush1.bf16.msra.mxu0 0
    %585 = vmatprep.subr.bf16.mxu0 0
    %586 = vmatpush1.bf16.msra.mxu0 0
    %587 = vmatprep.subr.bf16.mxu0 0
    %588 = vmatpush1.bf16.msra.mxu0 0
    %589 = vmatprep.subr.bf16.mxu0 0
    %590 = vmatpush1.bf16.msra.mxu0 0
    %591 = vmatprep.mubr.bf16.mxu0 0
    %592 = vmatmul.mubr.bf16.gmra.mrb[0].mxu0 %v557
    %v593 = vpop.f32.mrb[0].mxu0
    %v594 = vadd.f32 %v547, %v593
    %v595 = vpop.f32.mrb[0].mxu0
    %v596 = vpop.f32.mrb[0].mxu0
    %v597 = vadd.f32 %v550, %v596
    %v598 = vpop.f32.mrb[0].mxu0
    %599 = vdwg.mxu0
    %600 = vst [vmem:[#allocation10 + $0x18] sm:$0xff] %v594
    %601 = vst [vmem:[#allocation10 + $0x38] sm:$0xff] %v597
    // Predicated region
    $region34: #{tpu_custom_call.1} parent=1 // pred_check
      _
    $region35: #{tpu_custom_call.1} parent=1 // pred_check_branch
      %603 = sbr.rel (0) target = $region37
    $region36: #{tpu_custom_call.1} parent=1 // pred_region
      %s605 = ssub.s32 1024, 1024
      %606 = vsyncadd [#allocation4], %s605
      %s607 = sshll.u32 [#allocation10], 4
      %s608 = int_to_ptr.vmem [resolvable:$true] %s607
      %613 = dma.vmem_to_hbm [thread:$0]  %s608, 1024, %s4, [#allocation4], 512, 512, 32
    $region37: #{tpu_custom_call.1} parent=1 // pred_fallthru
      _
    // Predicated region
    $region38: #{tpu_custom_call.1} parent=1 // pred_check
      _
    $region39: #{tpu_custom_call.1} parent=1 // pred_check_branch
      %615 = sbr.rel (0) target = $region41
    $region40: #{tpu_custom_call.1} parent=1 // pred_region
      %616 = dma.done [#allocation4], 1024
    $region41: #{tpu_custom_call.1} parent=1 // pred_fallthru
      _
    %617 = vsyncpa [#allocation3], 1
    %618 = vsyncpa [#allocation6], 1
    %619 = vsyncpa [#allocation9], 1
    %620 = vsyncpa [#allocation4], 1

</llo_original>
